<compile_context>
chip_gen: v5e
topology: v5e:2x2
jax: 0.10.0
libtpu: 0.0.40
codegen_flags: <defaults>
</compile_context>

<pallas_src>
import math
from functools import partial

import jax
import jax.numpy as jnp
from jax import lax
from jax.experimental import pallas as pl
from jax.experimental.pallas import tpu as pltpu


# ----------------------------------------------------------------------------
# Fused kernel: cross-attn -> add+LN -> self-attn -> add+LN -> VQ
# One grid step == one batch element (grid axis is "parallel").
# ----------------------------------------------------------------------------
def _fused_forward_kernel(
    x_enc_ref, z_ref, e0_ref,
    wq1_ref, bq1_ref, wkv1_ref, bkv1_ref, wo1_ref, bo1_ref,
    g1_ref, b1_ref,
    wqkv2_ref, bqkv2_ref, wo2_ref, bo2_ref,
    g2_ref, b2_ref,
    zq_out_ref, emb_out_ref, enc_out_ref,
    *, S, M, D, n_e, n_heads, d_k, d_v):

    Hdk = n_heads * d_k
    Hdv = n_heads * d_v
    f32 = jnp.float32
    scale = 1.0 / math.sqrt(d_k)

    def attend(Q, K, V):
        # Q: (Nq, Hdk), K: (Nk, Hdk), V: (Nk, Hdv) -> (Nq, Hdv).
        # 1/sqrt(d_k) already folded into Q. Result returned directly
        # (no VMEM scratch round-trip).
        if n_heads == 1:
            s = jnp.dot(Q, K.T, preferred_element_type=f32)
            s = s - jnp.max(s, axis=-1, keepdims=True)
            p = jnp.exp(s)
            p = p * pl.reciprocal(jnp.sum(p, axis=-1, keepdims=True), approx=True)
            return jnp.dot(p, V, preferred_element_type=f32)
        # Head-batched path for n_heads > 1 (single batched matmul pair).
        nq, nk = Q.shape[0], K.shape[0]
        Qh = Q.reshape(nq, n_heads, d_k)
        Kh = K.reshape(nk, n_heads, d_k)
        Vh = V.reshape(nk, n_heads, d_v)
        s = jnp.einsum('qhd,khd->hqk', Qh, Kh, preferred_element_type=f32)
        s = s - jnp.max(s, axis=-1, keepdims=True)
        p = jnp.exp(s)
        p = p * pl.reciprocal(jnp.sum(p, axis=-1, keepdims=True), approx=True)
        o = jnp.einsum('hqk,khd->qhd', p, Vh, preferred_element_type=f32)
        return o.reshape(nq, Hdv)

    def layernorm(v, g, b):                       # PyTorch LayerNorm, eps=1e-5
        mu = jnp.mean(v, axis=-1, keepdims=True)
        var = jnp.mean((v - mu) ** 2, axis=-1, keepdims=True)
        return (v - mu) * lax.rsqrt(var + 1e-5) * g + b

    # Conditioned codebook query: embedding + positional encoding, pre-fused.
    e0 = e0_ref[...]                                           # (n_e, D)

    # ---- cross-attention: queries = codebook, keys/values = memory --------
    x = x_enc_ref[...]                                         # (S, D)
    kv = jnp.dot(x, wkv1_ref[...], preferred_element_type=f32) + bkv1_ref[...]
    k1 = kv[:, :Hdk]
    v1 = kv[:, Hdk:]
    q1 = (jnp.dot(e0, wq1_ref[...], preferred_element_type=f32)
          + bq1_ref[...]) * scale                              # (n_e, Hdk)
    o1 = attend(q1, k1, v1)                                    # (n_e, Hdv)
    y1 = jnp.dot(o1, wo1_ref[...], preferred_element_type=f32) + bo1_ref[...]
    emb1 = layernorm(e0 + y1, g1_ref[...], b1_ref[...])        # (n_e, D)

    # ---- self-attention over the conditioned codebook ----------------------
    qkv = jnp.dot(emb1, wqkv2_ref[...], preferred_element_type=f32) + bqkv2_ref[...]
    q2 = qkv[:, :Hdk] * scale
    k2 = qkv[:, Hdk:2 * Hdk]
    v2 = qkv[:, 2 * Hdk:]
    o2 = attend(q2, k2, v2)                                    # (n_e, Hdv)
    y2 = jnp.dot(o2, wo2_ref[...], preferred_element_type=f32) + bo2_ref[...]
    emb2 = layernorm(emb1 + y2, g2_ref[...], b2_ref[...])      # (n_e, D)
    # self.proj is nn.Identity (d_proj == d_model)

    # ---- VQ: squared distances, first-argmin one-hot, z_q ------------------
    z = z_ref[...]                                             # (M, D)
    z_sq = jnp.sum(z * z, axis=-1, keepdims=True)              # (M, 1)
    e_sq = jnp.sum(emb2 * emb2, axis=-1)                       # (n_e,)
    cross = jnp.dot(z, emb2.T, preferred_element_type=f32)     # (M, n_e)
    d = z_sq - 2.0 * cross + e_sq[None, :]                     # (M, n_e)

    dmin = jnp.min(d, axis=-1, keepdims=True)
    col = lax.broadcasted_iota(jnp.int32, d.shape, 1)
    # first index attaining the minimum (matches torch.argmin behaviour)
    idx = jnp.min(jnp.where(d <= dmin, col, n_e), axis=-1, keepdims=True)
    onehot = (col == idx).astype(f32)                          # (M, n_e)
    z_q = jnp.dot(onehot, emb2, preferred_element_type=f32)    # (M, D)

    # ---- single full-ref stores (no per-slice masked vst loops) ------------
    zq_out_ref[...] = z_q
    emb_out_ref[...] = emb2
    enc_out_ref[...] = onehot


# ----------------------------------------------------------------------------
# Parameters / positional encoding (plain-JAX setup glue, runs once)
# ----------------------------------------------------------------------------
def positional_encoding(n_pos, d_model):
    pos = jnp.arange(n_pos, dtype=jnp.float32)[:, None]
    div = jnp.exp(jnp.arange(0, d_model, 2, dtype=jnp.float32)
                  * (-math.log(10000.0) / d_model))
    pe = jnp.zeros((n_pos, d_model), jnp.float32)
    pe = pe.at[:, 0::2].set(jnp.sin(pos * div))
    pe = pe.at[:, 1::2].set(jnp.cos(pos * div))
    return pe


def _linear_params(key, fan_in, fan_out):
    kw, kb = jax.random.split(key)
    w = jax.random.normal(kw, (fan_in, fan_out), jnp.float32) / math.sqrt(fan_in)
    b = 0.01 * jax.random.normal(kb, (1, fan_out), jnp.float32)
    return w, b


def _mha_params(key, d_model, d_k, d_v, n_heads):
    ks = jax.random.split(key, 4)
    wq, bq = _linear_params(ks[0], d_model, n_heads * d_k)
    wk, bk = _linear_params(ks[1], d_model, n_heads * d_k)
    wv, bv = _linear_params(ks[2], d_model, n_heads * d_v)
    wo, bo = _linear_params(ks[3], n_heads * d_v, d_model)
    return wq, bq, wk, bk, wv, bv, wo, bo


def init_params(key, *, d_model, d_k, d_v, n_heads, n_e):
    """Weights are pre-packed (K|V and Q|K|V) and e0 = embedding + PE is
    pre-fused here, so the per-call path has zero concat/add overhead."""
    ks = jax.random.split(key, 3)
    embedding = jax.random.normal(ks[0], (n_e, d_model), jnp.float32)
    wq1, bq1, wk1, bk1, wv1, bv1, wo1, bo1 = _mha_params(ks[1], d_model, d_k, d_v, n_heads)
    wq2, bq2, wk2, bk2, wv2, bv2, wo2, bo2 = _mha_params(ks[2], d_model, d_k, d_v, n_heads)
    return {
        "e0": embedding + positional_encoding(n_e, d_model),     # (n_e, D)
        "wq1": wq1, "bq1": bq1,
        "wkv1": jnp.concatenate([wk1, wv1], axis=1),
        "bkv1": jnp.concatenate([bk1, bv1], axis=1),
        "wo1": wo1, "bo1": bo1,
        "norm_g": jnp.ones((1, d_model), jnp.float32),
        "norm_b": jnp.zeros((1, d_model), jnp.float32),
        "wqkv2": jnp.concatenate([wq2, wk2, wv2], axis=1),
        "bqkv2": jnp.concatenate([bq2, bk2, bv2], axis=1),
        "wo2": wo2, "bo2": bo2,
        "emb_norm_g": jnp.ones((1, d_model), jnp.float32),
        "emb_norm_b": jnp.zeros((1, d_model), jnp.float32),
    }


# ----------------------------------------------------------------------------
# Forward pass (mirrors VariationalQuantizationLayer.forward)
# ----------------------------------------------------------------------------
def variational_quantization_forward(params, x_enc, z, *,
                                     n_heads, d_k, d_v, n_e, beta):
    B, S, D = x_enc.shape
    _, M, _ = z.shape
    Hdk = n_heads * d_k
    Hdv = n_heads * d_v

    # Host-side (metadata-only) batch flattening: everything in-kernel is 2-D.
    x_flat = x_enc.reshape(B * S, D)
    z_flat = z.reshape(B * M, D)

    full = lambda b: (0, 0)        # shared weights: same block every step
    batched = lambda b: (b, 0)     # per-batch slabs

    in_specs = [
        pl.BlockSpec((S, D), batched),                      # x_enc
        pl.BlockSpec((M, D), batched),                      # z
        pl.BlockSpec((n_e, D), full),                       # e0
        pl.BlockSpec((D, Hdk), full), pl.BlockSpec((1, Hdk), full),              # wq1,bq1
        pl.BlockSpec((D, Hdk + Hdv), full), pl.BlockSpec((1, Hdk + Hdv), full),  # wkv1,bkv1
        pl.BlockSpec((Hdv, D), full), pl.BlockSpec((1, D), full),                # wo1,bo1
        pl.BlockSpec((1, D), full), pl.BlockSpec((1, D), full),                  # norm g,b
        pl.BlockSpec((D, 2 * Hdk + Hdv), full), pl.BlockSpec((1, 2 * Hdk + Hdv), full),
        pl.BlockSpec((Hdv, D), full), pl.BlockSpec((1, D), full),                # wo2,bo2
        pl.BlockSpec((1, D), full), pl.BlockSpec((1, D), full),                  # emb norm g,b
    ]
    out_specs = [
        pl.BlockSpec((M, D), batched),       # z_q (flat)
        pl.BlockSpec((n_e, D), batched),     # embedding (flat)
        pl.BlockSpec((M, n_e), batched),     # one-hot min-encodings (flat)
    ]
    out_shape = (
        jax.ShapeDtypeStruct((B * M, D), jnp.float32),
        jax.ShapeDtypeStruct((B * n_e, D), jnp.float32),
        jax.ShapeDtypeStruct((B * M, n_e), jnp.float32),
    )

    # Advisory cost estimate so XLA schedules sensibly around this cheap call.
    flops = 2 * B * (S * D * (Hdk + Hdv) + n_e * D * Hdk
                     + n_e * S * (Hdk + Hdv) + 2 * n_e * Hdv * D
                     + n_e * D * (2 * Hdk + Hdv) + n_e * n_e * (Hdk + Hdv)
                     + 2 * M * n_e * D)
    weight_bytes = 4 * sum(int(v.size) for v in jax.tree_util.tree_leaves(params))
    io_bytes = (4 * (int(x_flat.size) + int(z_flat.size)) + weight_bytes
                + 4 * (B * M * D + B * n_e * D + B * M * n_e))

    zq_flat, emb_flat, enc_flat = pl.pallas_call(
        partial(_fused_forward_kernel, S=S, M=M, D=D, n_e=n_e,
                n_heads=n_heads, d_k=d_k, d_v=d_v),
        grid_spec=pltpu.PrefetchScalarGridSpec(
            num_scalar_prefetch=0, grid=(B,),
            in_specs=in_specs, out_specs=out_specs),
        out_shape=out_shape,
        compiler_params=pltpu.CompilerParams(
            dimension_semantics=("parallel",)),      # 2 TCs on v7x
        cost_estimate=pl.CostEstimate(flops=int(flops),
                                      transcendentals=int(B * n_e * (S + n_e)),
                                      bytes_accessed=int(io_bytes)),
    )(x_flat, z_flat, params["e0"],
      params["wq1"], params["bq1"], params["wkv1"], params["bkv1"],
      params["wo1"], params["bo1"], params["norm_g"], params["norm_b"],
      params["wqkv2"], params["bqkv2"], params["wo2"], params["bo2"],
      params["emb_norm_g"], params["emb_norm_b"])

    # Free (metadata-only) reshapes back to the module's shapes.
    z_q = zq_flat.reshape(B, M, D)
    embedding = emb_flat.reshape(B, n_e, D)
    min_encodings = enc_flat                                   # (B*M, n_e)

    # Tiny scalar glue on returned tensors (jit-fused XLA).
    mse = jnp.mean((z_q - z) ** 2)          # mean(mean(., -1)) == full mean
    loss = jnp.zeros((1,), jnp.float32) + (beta + 1.0) * mse
    # z_q = z + (z_q - z).detach() -> forward value unchanged
    e_mean = jnp.mean(min_encodings, axis=0)
    perplexity = jnp.exp(-jnp.sum(e_mean * jnp.log(e_mean + 1e-10)))
    min_encoding_indices = jnp.argmax(min_encodings, axis=-1).astype(jnp.int32)
    min_encoding_indices = min_encoding_indices.reshape(B, M)

    return z_q, loss, perplexity, min_encodings, min_encoding_indices, embedding


# ----------------------------------------------------------------------------
if __name__ == "__main__":
    B, S_ENC, M = 2, 8, 8
    D_MODEL, D_K, D_V, N_HEADS, N_E, BETA = 32, 16, 16, 1, 16, 0.5

    key = jax.random.PRNGKey(0)
    k_p, k_x, k_z = jax.random.split(key, 3)

    params = init_params(k_p, d_model=D_MODEL, d_k=D_K, d_v=D_V,
                         n_heads=N_HEADS, n_e=N_E)
    x_enc = jax.random.normal(k_x, (B, S_ENC, D_MODEL), jnp.float32)
    z = jax.random.normal(k_z, (B, M, D_MODEL), jnp.float32)

    fwd = jax.jit(partial(variational_quantization_forward,
                          n_heads=N_HEADS, d_k=D_K, d_v=D_V, n_e=N_E, beta=BETA))
    outs = jax.block_until_ready(fwd(params, x_enc, z))

    z_q, loss, perplexity, min_encodings, min_idx, embedding = outs
    assert z_q.shape == (B, M, D_MODEL)
    assert loss.shape == (1,)
    assert min_encodings.shape == (B * M, N_E)
    assert min_idx.shape == (B, M)
    assert embedding.shape == (B, N_E, D_MODEL)
    assert bool(jnp.all(jnp.isfinite(z_q))) and bool(jnp.isfinite(loss[0]))
    assert bool(jnp.isfinite(perplexity))
    # each row of the one-hot min-encodings must sum to exactly 1
    assert bool(jnp.all(jnp.sum(min_encodings, axis=-1) == 1.0))
    print("KERNEL_OK")
</pallas_src>

<mosaic_0001>
module attributes {stable_mosaic.version = 11 : i64} {
  func.func @_fused_forward_kernel(%arg0: i32, %arg1: memref<8x32xf32, #tpu.memory_space<vmem>>, %arg2: memref<8x32xf32, #tpu.memory_space<vmem>>, %arg3: memref<16x32xf32, #tpu.memory_space<vmem>>, %arg4: memref<32x16xf32, #tpu.memory_space<vmem>>, %arg5: memref<1x16xf32, #tpu.memory_space<vmem>>, %arg6: memref<32x32xf32, #tpu.memory_space<vmem>>, %arg7: memref<1x32xf32, #tpu.memory_space<vmem>>, %arg8: memref<16x32xf32, #tpu.memory_space<vmem>>, %arg9: memref<1x32xf32, #tpu.memory_space<vmem>>, %arg10: memref<1x32xf32, #tpu.memory_space<vmem>>, %arg11: memref<1x32xf32, #tpu.memory_space<vmem>>, %arg12: memref<32x48xf32, #tpu.memory_space<vmem>>, %arg13: memref<1x48xf32, #tpu.memory_space<vmem>>, %arg14: memref<16x32xf32, #tpu.memory_space<vmem>>, %arg15: memref<1x32xf32, #tpu.memory_space<vmem>>, %arg16: memref<1x32xf32, #tpu.memory_space<vmem>>, %arg17: memref<1x32xf32, #tpu.memory_space<vmem>>, %arg18: memref<8x32xf32, #tpu.memory_space<vmem>>, %arg19: memref<16x32xf32, #tpu.memory_space<vmem>>, %arg20: memref<8x16xf32, #tpu.memory_space<vmem>>) attributes {dimension_semantics = [#tpu.dimension_semantics<parallel>], iteration_bounds = array<i64: 2>, scalar_prefetch = 0 : i64, scratch_operands = 0 : i64, tpu.core_type = #tpu.core_type<tc>, window_params = [{transform_indices = @transform_0, window_bounds = array<i64: 8, 32>}, {transform_indices = @transform_1, window_bounds = array<i64: 8, 32>}, {pipeline_mode = #tpu.pipeline_mode<synchronous>, transform_indices = @transform_2, window_bounds = array<i64: 16, 32>}, {pipeline_mode = #tpu.pipeline_mode<synchronous>, transform_indices = @transform_3, window_bounds = array<i64: 32, 16>}, {pipeline_mode = #tpu.pipeline_mode<synchronous>, transform_indices = @transform_4, window_bounds = array<i64: 1, 16>}, {pipeline_mode = #tpu.pipeline_mode<synchronous>, transform_indices = @transform_5, window_bounds = array<i64: 32, 32>}, {pipeline_mode = #tpu.pipeline_mode<synchronous>, transform_indices = @transform_6, window_bounds = array<i64: 1, 32>}, {pipeline_mode = #tpu.pipeline_mode<synchronous>, transform_indices = @transform_7, window_bounds = array<i64: 16, 32>}, {pipeline_mode = #tpu.pipeline_mode<synchronous>, transform_indices = @transform_8, window_bounds = array<i64: 1, 32>}, {pipeline_mode = #tpu.pipeline_mode<synchronous>, transform_indices = @transform_9, window_bounds = array<i64: 1, 32>}, {pipeline_mode = #tpu.pipeline_mode<synchronous>, transform_indices = @transform_10, window_bounds = array<i64: 1, 32>}, {pipeline_mode = #tpu.pipeline_mode<synchronous>, transform_indices = @transform_11, window_bounds = array<i64: 32, 48>}, {pipeline_mode = #tpu.pipeline_mode<synchronous>, transform_indices = @transform_12, window_bounds = array<i64: 1, 48>}, {pipeline_mode = #tpu.pipeline_mode<synchronous>, transform_indices = @transform_13, window_bounds = array<i64: 16, 32>}, {pipeline_mode = #tpu.pipeline_mode<synchronous>, transform_indices = @transform_14, window_bounds = array<i64: 1, 32>}, {pipeline_mode = #tpu.pipeline_mode<synchronous>, transform_indices = @transform_15, window_bounds = array<i64: 1, 32>}, {pipeline_mode = #tpu.pipeline_mode<synchronous>, transform_indices = @transform_16, window_bounds = array<i64: 1, 32>}, {transform_indices = @transform_17, window_bounds = array<i64: 8, 32>}, {transform_indices = @transform_18, window_bounds = array<i64: 16, 32>}, {transform_indices = @transform_19, window_bounds = array<i64: 8, 16>}]} {
    %c0 = arith.constant 0 : index
    %c0_0 = arith.constant 0 : index
    %0 = vector.load %arg3[%c0, %c0_0] : memref<16x32xf32, #tpu.memory_space<vmem>>, vector<16x32xf32>
    %c0_1 = arith.constant 0 : index
    %c0_2 = arith.constant 0 : index
    %1 = vector.load %arg1[%c0_1, %c0_2] : memref<8x32xf32, #tpu.memory_space<vmem>>, vector<8x32xf32>
    %c0_3 = arith.constant 0 : index
    %c0_4 = arith.constant 0 : index
    %2 = vector.load %arg6[%c0_3, %c0_4] : memref<32x32xf32, #tpu.memory_space<vmem>>, vector<32x32xf32>
    %cst = arith.constant dense<0.000000e+00> : vector<8x32xf32>
    %3 = tpu.matmul %1, %2, %cst {dimension_numbers = #tpu.dot_dimension_numbers<[1], [0], [0], [1], [0, 0, 1, 1], [], []>} : vector<8x32xf32>, vector<32x32xf32>, vector<8x32xf32> -> vector<8x32xf32>
    %c0_5 = arith.constant 0 : index
    %c0_6 = arith.constant 0 : index
    %4 = vector.load %arg7[%c0_5, %c0_6] : memref<1x32xf32, #tpu.memory_space<vmem>>, vector<1x32xf32>
    %5 = vector.broadcast %4 : vector<1x32xf32> to vector<8x32xf32>
    %6 = arith.addf %3, %5 : vector<8x32xf32>
    %7 = vector.extract_strided_slice %6 {offsets = [0, 0], sizes = [8, 16], strides = [1, 1]} : vector<8x32xf32> to vector<8x16xf32>
    %8 = vector.extract_strided_slice %6 {offsets = [0, 16], sizes = [8, 16], strides = [1, 1]} : vector<8x32xf32> to vector<8x16xf32>
    %c0_7 = arith.constant 0 : index
    %c0_8 = arith.constant 0 : index
    %9 = vector.load %arg4[%c0_7, %c0_8] : memref<32x16xf32, #tpu.memory_space<vmem>>, vector<32x16xf32>
    %cst_9 = arith.constant dense<0.000000e+00> : vector<16x16xf32>
    %10 = tpu.matmul %0, %9, %cst_9 {dimension_numbers = #tpu.dot_dimension_numbers<[1], [0], [0], [1], [0, 0, 1, 1], [], []>} : vector<16x32xf32>, vector<32x16xf32>, vector<16x16xf32> -> vector<16x16xf32>
    %c0_10 = arith.constant 0 : index
    %c0_11 = arith.constant 0 : index
    %11 = vector.load %arg5[%c0_10, %c0_11] : memref<1x16xf32, #tpu.memory_space<vmem>>, vector<1x16xf32>
    %12 = vector.broadcast %11 : vector<1x16xf32> to vector<16x16xf32>
    %13 = arith.addf %10, %12 : vector<16x16xf32>
    %cst_12 = arith.constant 2.500000e-01 : f32
    %14 = vector.broadcast %cst_12 : f32 to vector<16x16xf32>
    %15 = arith.mulf %13, %14 : vector<16x16xf32>
    %16 = tpu.transpose %7, [1, 0] : vector<8x16xf32> -> vector<16x8xf32>
    %cst_13 = arith.constant dense<0.000000e+00> : vector<16x8xf32>
    %17 = tpu.matmul %15, %16, %cst_13 {dimension_numbers = #tpu.dot_dimension_numbers<[1], [0], [0], [1], [0, 0, 1, 1], [], []>} : vector<16x16xf32>, vector<16x8xf32>, vector<16x8xf32> -> vector<16x8xf32>
    %cst_14 = arith.constant dense<0xFF800000> : vector<16xf32>
    %18 = vector.multi_reduction <maximumf>, %17, %cst_14 [1] : vector<16x8xf32> to vector<16xf32>
    %19 = vector.shape_cast %18 : vector<16xf32> to vector<16x1xf32>
    %20 = vector.broadcast %19 : vector<16x1xf32> to vector<16x8xf32>
    %21 = arith.subf %17, %20 : vector<16x8xf32>
    %22 = math.exp %21 : vector<16x8xf32>
    %cst_15 = arith.constant dense<0.000000e+00> : vector<16xf32>
    %23 = vector.multi_reduction <add>, %22, %cst_15 [1] : vector<16x8xf32> to vector<16xf32>
    %24 = vector.shape_cast %23 : vector<16xf32> to vector<16x1xf32>
    %25 = tpu.reciprocal %24 {approx = true} : vector<16x1xf32> -> vector<16x1xf32>
    %26 = vector.broadcast %25 : vector<16x1xf32> to vector<16x8xf32>
    %27 = arith.mulf %22, %26 : vector<16x8xf32>
    %cst_16 = arith.constant dense<0.000000e+00> : vector<16x16xf32>
    %28 = tpu.matmul %27, %8, %cst_16 {dimension_numbers = #tpu.dot_dimension_numbers<[1], [0], [0], [1], [0, 0, 1, 1], [], []>} : vector<16x8xf32>, vector<8x16xf32>, vector<16x16xf32> -> vector<16x16xf32>
    %c0_17 = arith.constant 0 : index
    %c0_18 = arith.constant 0 : index
    %29 = vector.load %arg8[%c0_17, %c0_18] : memref<16x32xf32, #tpu.memory_space<vmem>>, vector<16x32xf32>
    %cst_19 = arith.constant dense<0.000000e+00> : vector<16x32xf32>
    %30 = tpu.matmul %28, %29, %cst_19 {dimension_numbers = #tpu.dot_dimension_numbers<[1], [0], [0], [1], [0, 0, 1, 1], [], []>} : vector<16x16xf32>, vector<16x32xf32>, vector<16x32xf32> -> vector<16x32xf32>
    %c0_20 = arith.constant 0 : index
    %c0_21 = arith.constant 0 : index
    %31 = vector.load %arg9[%c0_20, %c0_21] : memref<1x32xf32, #tpu.memory_space<vmem>>, vector<1x32xf32>
    %32 = vector.broadcast %31 : vector<1x32xf32> to vector<16x32xf32>
    %33 = arith.addf %30, %32 : vector<16x32xf32>
    %34 = arith.addf %0, %33 : vector<16x32xf32>
    %c0_22 = arith.constant 0 : index
    %c0_23 = arith.constant 0 : index
    %35 = vector.load %arg10[%c0_22, %c0_23] : memref<1x32xf32, #tpu.memory_space<vmem>>, vector<1x32xf32>
    %c0_24 = arith.constant 0 : index
    %c0_25 = arith.constant 0 : index
    %36 = vector.load %arg11[%c0_24, %c0_25] : memref<1x32xf32, #tpu.memory_space<vmem>>, vector<1x32xf32>
    %cst_26 = arith.constant dense<0.000000e+00> : vector<16xf32>
    %37 = vector.multi_reduction <add>, %34, %cst_26 [1] : vector<16x32xf32> to vector<16xf32>
    %38 = vector.shape_cast %37 : vector<16xf32> to vector<16x1xf32>
    %cst_27 = arith.constant 3.200000e+01 : f32
    %39 = vector.broadcast %cst_27 : f32 to vector<16x1xf32>
    %40 = arith.divf %38, %39 : vector<16x1xf32>
    %41 = vector.broadcast %40 : vector<16x1xf32> to vector<16x32xf32>
    %42 = arith.subf %34, %41 : vector<16x32xf32>
    %43 = arith.mulf %42, %42 : vector<16x32xf32>
    %cst_28 = arith.constant dense<0.000000e+00> : vector<16xf32>
    %44 = vector.multi_reduction <add>, %43, %cst_28 [1] : vector<16x32xf32> to vector<16xf32>
    %45 = vector.shape_cast %44 : vector<16xf32> to vector<16x1xf32>
    %cst_29 = arith.constant 3.200000e+01 : f32
    %46 = vector.broadcast %cst_29 : f32 to vector<16x1xf32>
    %47 = arith.divf %45, %46 : vector<16x1xf32>
    %48 = vector.broadcast %40 : vector<16x1xf32> to vector<16x32xf32>
    %49 = arith.subf %34, %48 : vector<16x32xf32>
    %cst_30 = arith.constant 9.99999974E-6 : f32
    %50 = vector.broadcast %cst_30 : f32 to vector<16x1xf32>
    %51 = arith.addf %47, %50 : vector<16x1xf32>
    %52 = math.rsqrt %51 : vector<16x1xf32>
    %53 = vector.broadcast %52 : vector<16x1xf32> to vector<16x32xf32>
    %54 = arith.mulf %49, %53 : vector<16x32xf32>
    %55 = vector.broadcast %35 : vector<1x32xf32> to vector<16x32xf32>
    %56 = arith.mulf %54, %55 : vector<16x32xf32>
    %57 = vector.broadcast %36 : vector<1x32xf32> to vector<16x32xf32>
    %58 = arith.addf %56, %57 : vector<16x32xf32>
    %c0_31 = arith.constant 0 : index
    %c0_32 = arith.constant 0 : index
    %59 = vector.load %arg12[%c0_31, %c0_32] : memref<32x48xf32, #tpu.memory_space<vmem>>, vector<32x48xf32>
    %cst_33 = arith.constant dense<0.000000e+00> : vector<16x48xf32>
    %60 = tpu.matmul %58, %59, %cst_33 {dimension_numbers = #tpu.dot_dimension_numbers<[1], [0], [0], [1], [0, 0, 1, 1], [], []>} : vector<16x32xf32>, vector<32x48xf32>, vector<16x48xf32> -> vector<16x48xf32>
    %c0_34 = arith.constant 0 : index
    %c0_35 = arith.constant 0 : index
    %61 = vector.load %arg13[%c0_34, %c0_35] : memref<1x48xf32, #tpu.memory_space<vmem>>, vector<1x48xf32>
    %62 = vector.broadcast %61 : vector<1x48xf32> to vector<16x48xf32>
    %63 = arith.addf %60, %62 : vector<16x48xf32>
    %64 = vector.extract_strided_slice %63 {offsets = [0, 0], sizes = [16, 16], strides = [1, 1]} : vector<16x48xf32> to vector<16x16xf32>
    %cst_36 = arith.constant 2.500000e-01 : f32
    %65 = vector.broadcast %cst_36 : f32 to vector<16x16xf32>
    %66 = arith.mulf %64, %65 : vector<16x16xf32>
    %67 = vector.extract_strided_slice %63 {offsets = [0, 16], sizes = [16, 16], strides = [1, 1]} : vector<16x48xf32> to vector<16x16xf32>
    %68 = vector.extract_strided_slice %63 {offsets = [0, 32], sizes = [16, 16], strides = [1, 1]} : vector<16x48xf32> to vector<16x16xf32>
    %69 = tpu.transpose %67, [1, 0] : vector<16x16xf32> -> vector<16x16xf32>
    %cst_37 = arith.constant dense<0.000000e+00> : vector<16x16xf32>
    %70 = tpu.matmul %66, %69, %cst_37 {dimension_numbers = #tpu.dot_dimension_numbers<[1], [0], [0], [1], [0, 0, 1, 1], [], []>} : vector<16x16xf32>, vector<16x16xf32>, vector<16x16xf32> -> vector<16x16xf32>
    %cst_38 = arith.constant dense<0xFF800000> : vector<16xf32>
    %71 = vector.multi_reduction <maximumf>, %70, %cst_38 [1] : vector<16x16xf32> to vector<16xf32>
    %72 = vector.shape_cast %71 : vector<16xf32> to vector<16x1xf32>
    %73 = vector.broadcast %72 : vector<16x1xf32> to vector<16x16xf32>
    %74 = arith.subf %70, %73 : vector<16x16xf32>
    %75 = math.exp %74 : vector<16x16xf32>
    %cst_39 = arith.constant dense<0.000000e+00> : vector<16xf32>
    %76 = vector.multi_reduction <add>, %75, %cst_39 [1] : vector<16x16xf32> to vector<16xf32>
    %77 = vector.shape_cast %76 : vector<16xf32> to vector<16x1xf32>
    %78 = tpu.reciprocal %77 {approx = true} : vector<16x1xf32> -> vector<16x1xf32>
    %79 = vector.broadcast %78 : vector<16x1xf32> to vector<16x16xf32>
    %80 = arith.mulf %75, %79 : vector<16x16xf32>
    %cst_40 = arith.constant dense<0.000000e+00> : vector<16x16xf32>
    %81 = tpu.matmul %80, %68, %cst_40 {dimension_numbers = #tpu.dot_dimension_numbers<[1], [0], [0], [1], [0, 0, 1, 1], [], []>} : vector<16x16xf32>, vector<16x16xf32>, vector<16x16xf32> -> vector<16x16xf32>
    %c0_41 = arith.constant 0 : index
    %c0_42 = arith.constant 0 : index
    %82 = vector.load %arg14[%c0_41, %c0_42] : memref<16x32xf32, #tpu.memory_space<vmem>>, vector<16x32xf32>
    %cst_43 = arith.constant dense<0.000000e+00> : vector<16x32xf32>
    %83 = tpu.matmul %81, %82, %cst_43 {dimension_numbers = #tpu.dot_dimension_numbers<[1], [0], [0], [1], [0, 0, 1, 1], [], []>} : vector<16x16xf32>, vector<16x32xf32>, vector<16x32xf32> -> vector<16x32xf32>
    %c0_44 = arith.constant 0 : index
    %c0_45 = arith.constant 0 : index
    %84 = vector.load %arg15[%c0_44, %c0_45] : memref<1x32xf32, #tpu.memory_space<vmem>>, vector<1x32xf32>
    %85 = vector.broadcast %84 : vector<1x32xf32> to vector<16x32xf32>
    %86 = arith.addf %83, %85 : vector<16x32xf32>
    %87 = arith.addf %58, %86 : vector<16x32xf32>
    %c0_46 = arith.constant 0 : index
    %c0_47 = arith.constant 0 : index
    %88 = vector.load %arg16[%c0_46, %c0_47] : memref<1x32xf32, #tpu.memory_space<vmem>>, vector<1x32xf32>
    %c0_48 = arith.constant 0 : index
    %c0_49 = arith.constant 0 : index
    %89 = vector.load %arg17[%c0_48, %c0_49] : memref<1x32xf32, #tpu.memory_space<vmem>>, vector<1x32xf32>
    %cst_50 = arith.constant dense<0.000000e+00> : vector<16xf32>
    %90 = vector.multi_reduction <add>, %87, %cst_50 [1] : vector<16x32xf32> to vector<16xf32>
    %91 = vector.shape_cast %90 : vector<16xf32> to vector<16x1xf32>
    %cst_51 = arith.constant 3.200000e+01 : f32
    %92 = vector.broadcast %cst_51 : f32 to vector<16x1xf32>
    %93 = arith.divf %91, %92 : vector<16x1xf32>
    %94 = vector.broadcast %93 : vector<16x1xf32> to vector<16x32xf32>
    %95 = arith.subf %87, %94 : vector<16x32xf32>
    %96 = arith.mulf %95, %95 : vector<16x32xf32>
    %cst_52 = arith.constant dense<0.000000e+00> : vector<16xf32>
    %97 = vector.multi_reduction <add>, %96, %cst_52 [1] : vector<16x32xf32> to vector<16xf32>
    %98 = vector.shape_cast %97 : vector<16xf32> to vector<16x1xf32>
    %cst_53 = arith.constant 3.200000e+01 : f32
    %99 = vector.broadcast %cst_53 : f32 to vector<16x1xf32>
    %100 = arith.divf %98, %99 : vector<16x1xf32>
    %101 = vector.broadcast %93 : vector<16x1xf32> to vector<16x32xf32>
    %102 = arith.subf %87, %101 : vector<16x32xf32>
    %cst_54 = arith.constant 9.99999974E-6 : f32
    %103 = vector.broadcast %cst_54 : f32 to vector<16x1xf32>
    %104 = arith.addf %100, %103 : vector<16x1xf32>
    %105 = math.rsqrt %104 : vector<16x1xf32>
    %106 = vector.broadcast %105 : vector<16x1xf32> to vector<16x32xf32>
    %107 = arith.mulf %102, %106 : vector<16x32xf32>
    %108 = vector.broadcast %88 : vector<1x32xf32> to vector<16x32xf32>
    %109 = arith.mulf %107, %108 : vector<16x32xf32>
    %110 = vector.broadcast %89 : vector<1x32xf32> to vector<16x32xf32>
    %111 = arith.addf %109, %110 : vector<16x32xf32>
    %c0_55 = arith.constant 0 : index
    %c0_56 = arith.constant 0 : index
    %112 = vector.load %arg2[%c0_55, %c0_56] : memref<8x32xf32, #tpu.memory_space<vmem>>, vector<8x32xf32>
    %113 = arith.mulf %112, %112 : vector<8x32xf32>
    %cst_57 = arith.constant dense<0.000000e+00> : vector<8xf32>
    %114 = vector.multi_reduction <add>, %113, %cst_57 [1] : vector<8x32xf32> to vector<8xf32>
    %115 = vector.shape_cast %114 : vector<8xf32> to vector<8x1xf32>
    %116 = arith.mulf %111, %111 : vector<16x32xf32>
    %cst_58 = arith.constant dense<0.000000e+00> : vector<16xf32>
    %117 = vector.multi_reduction <add>, %116, %cst_58 [1] : vector<16x32xf32> to vector<16xf32>
    %118 = tpu.transpose %111, [1, 0] : vector<16x32xf32> -> vector<32x16xf32>
    %cst_59 = arith.constant dense<0.000000e+00> : vector<8x16xf32>
    %119 = tpu.matmul %112, %118, %cst_59 {dimension_numbers = #tpu.dot_dimension_numbers<[1], [0], [0], [1], [0, 0, 1, 1], [], []>} : vector<8x32xf32>, vector<32x16xf32>, vector<8x16xf32> -> vector<8x16xf32>
    %cst_60 = arith.constant 2.000000e+00 : f32
    %120 = vector.broadcast %cst_60 : f32 to vector<8x16xf32>
    %121 = arith.mulf %120, %119 : vector<8x16xf32>
    %122 = vector.broadcast %115 : vector<8x1xf32> to vector<8x16xf32>
    %123 = arith.subf %122, %121 : vector<8x16xf32>
    %124 = vector.shape_cast %117 : vector<16xf32> to vector<1x16xf32>
    %125 = vector.broadcast %124 : vector<1x16xf32> to vector<8x16xf32>
    %126 = arith.addf %123, %125 : vector<8x16xf32>
    %cst_61 = arith.constant dense<0x7F800000> : vector<8xf32>
    %127 = vector.multi_reduction <minimumf>, %126, %cst_61 [1] : vector<8x16xf32> to vector<8xf32>
    %128 = vector.shape_cast %127 : vector<8xf32> to vector<8x1xf32>
    %129 = tpu.iota {dimensions = array<i32: 1>} : vector<8x16xi32>
    %130 = vector.broadcast %128 : vector<8x1xf32> to vector<8x16xf32>
    %131 = arith.cmpf ole, %126, %130 : vector<8x16xf32>
    %c16_i32 = arith.constant 16 : i32
    %132 = vector.broadcast %c16_i32 : i32 to vector<8x16xi32>
    %133 = arith.select %131, %129, %132 : vector<8x16xi1>, vector<8x16xi32>
    %cst_62 = arith.constant dense<2147483647> : vector<8xi32>
    %134 = vector.multi_reduction <minsi>, %133, %cst_62 [1] : vector<8x16xi32> to vector<8xi32>
    %135 = vector.shape_cast %134 : vector<8xi32> to vector<8x1xi32>
    %136 = vector.broadcast %135 : vector<8x1xi32> to vector<8x16xi32>
    %137 = arith.cmpi eq, %129, %136 : vector<8x16xi32>
    %138 = arith.extui %137 : vector<8x16xi1> to vector<8x16xi32>
    %139 = arith.sitofp %138 : vector<8x16xi32> to vector<8x16xf32>
    %cst_63 = arith.constant dense<0.000000e+00> : vector<8x32xf32>
    %140 = tpu.matmul %139, %111, %cst_63 {dimension_numbers = #tpu.dot_dimension_numbers<[1], [0], [0], [1], [0, 0, 1, 1], [], []>} : vector<8x16xf32>, vector<16x32xf32>, vector<8x32xf32> -> vector<8x32xf32>
    %c0_64 = arith.constant 0 : index
    %c0_65 = arith.constant 0 : index
    %141 = vector.load %arg18[%c0_64, %c0_65] : memref<8x32xf32, #tpu.memory_space<vmem>>, vector<8x32xf32>
    tpu.vector_store %arg18[%c0_64, %c0_65], %140 {strides = array<i32>} : memref<8x32xf32, #tpu.memory_space<vmem>>, vector<8x32xf32>,
    %c0_66 = arith.constant 0 : index
    %c0_67 = arith.constant 0 : index
    %142 = vector.load %arg19[%c0_66, %c0_67] : memref<16x32xf32, #tpu.memory_space<vmem>>, vector<16x32xf32>
    tpu.vector_store %arg19[%c0_66, %c0_67], %111 {strides = array<i32>} : memref<16x32xf32, #tpu.memory_space<vmem>>, vector<16x32xf32>,
    %c0_68 = arith.constant 0 : index
    %c0_69 = arith.constant 0 : index
    %143 = vector.load %arg20[%c0_68, %c0_69] : memref<8x16xf32, #tpu.memory_space<vmem>>, vector<8x16xf32>
    tpu.vector_store %arg20[%c0_68, %c0_69], %139 {strides = array<i32>} : memref<8x16xf32, #tpu.memory_space<vmem>>, vector<8x16xf32>,
    return
  }
  func.func @transform_0(%arg0: i32) -> (i32, i32) {
    %c0_i32 = arith.constant 0 : i32
    %c0_i32_0 = arith.constant 0 : i32
    return %arg0, %c0_i32 : i32, i32
  }
  func.func @transform_1(%arg0: i32) -> (i32, i32) {
    %c0_i32 = arith.constant 0 : i32
    %c0_i32_0 = arith.constant 0 : i32
    return %arg0, %c0_i32 : i32, i32
  }
  func.func @transform_2(%arg0: i32) -> (i32, i32) {
    %c0_i32 = arith.constant 0 : i32
    %c0_i32_0 = arith.constant 0 : i32
    %c0_i32_1 = arith.constant 0 : i32
    return %c0_i32, %c0_i32_0 : i32, i32
  }
  func.func @transform_3(%arg0: i32) -> (i32, i32) {
    %c0_i32 = arith.constant 0 : i32
    %c0_i32_0 = arith.constant 0 : i32
    %c0_i32_1 = arith.constant 0 : i32
    return %c0_i32, %c0_i32_0 : i32, i32
  }
  func.func @transform_4(%arg0: i32) -> (i32, i32) {
    %c0_i32 = arith.constant 0 : i32
    %c0_i32_0 = arith.constant 0 : i32
    %c0_i32_1 = arith.constant 0 : i32
    return %c0_i32, %c0_i32_0 : i32, i32
  }
  func.func @transform_5(%arg0: i32) -> (i32, i32) {
    %c0_i32 = arith.constant 0 : i32
    %c0_i32_0 = arith.constant 0 : i32
    %c0_i32_1 = arith.constant 0 : i32
    return %c0_i32, %c0_i32_0 : i32, i32
  }
  func.func @transform_6(%arg0: i32) -> (i32, i32) {
    %c0_i32 = arith.constant 0 : i32
    %c0_i32_0 = arith.constant 0 : i32
    %c0_i32_1 = arith.constant 0 : i32
    return %c0_i32, %c0_i32_0 : i32, i32
  }
  func.func @transform_7(%arg0: i32) -> (i32, i32) {
    %c0_i32 = arith.constant 0 : i32
    %c0_i32_0 = arith.constant 0 : i32
    %c0_i32_1 = arith.constant 0 : i32
    return %c0_i32, %c0_i32_0 : i32, i32
  }
  func.func @transform_8(%arg0: i32) -> (i32, i32) {
    %c0_i32 = arith.constant 0 : i32
    %c0_i32_0 = arith.constant 0 : i32
    %c0_i32_1 = arith.constant 0 : i32
    return %c0_i32, %c0_i32_0 : i32, i32
  }
  func.func @transform_9(%arg0: i32) -> (i32, i32) {
    %c0_i32 = arith.constant 0 : i32
    %c0_i32_0 = arith.constant 0 : i32
    %c0_i32_1 = arith.constant 0 : i32
    return %c0_i32, %c0_i32_0 : i32, i32
  }
  func.func @transform_10(%arg0: i32) -> (i32, i32) {
    %c0_i32 = arith.constant 0 : i32
    %c0_i32_0 = arith.constant 0 : i32
    %c0_i32_1 = arith.constant 0 : i32
    return %c0_i32, %c0_i32_0 : i32, i32
  }
  func.func @transform_11(%arg0: i32) -> (i32, i32) {
    %c0_i32 = arith.constant 0 : i32
    %c0_i32_0 = arith.constant 0 : i32
    %c0_i32_1 = arith.constant 0 : i32
    return %c0_i32, %c0_i32_0 : i32, i32
  }
  func.func @transform_12(%arg0: i32) -> (i32, i32) {
    %c0_i32 = arith.constant 0 : i32
    %c0_i32_0 = arith.constant 0 : i32
    %c0_i32_1 = arith.constant 0 : i32
    return %c0_i32, %c0_i32_0 : i32, i32
  }
  func.func @transform_13(%arg0: i32) -> (i32, i32) {
    %c0_i32 = arith.constant 0 : i32
    %c0_i32_0 = arith.constant 0 : i32
    %c0_i32_1 = arith.constant 0 : i32
    return %c0_i32, %c0_i32_0 : i32, i32
  }
  func.func @transform_14(%arg0: i32) -> (i32, i32) {
    %c0_i32 = arith.constant 0 : i32
    %c0_i32_0 = arith.constant 0 : i32
    %c0_i32_1 = arith.constant 0 : i32
    return %c0_i32, %c0_i32_0 : i32, i32
  }
  func.func @transform_15(%arg0: i32) -> (i32, i32) {
    %c0_i32 = arith.constant 0 : i32
    %c0_i32_0 = arith.constant 0 : i32
    %c0_i32_1 = arith.constant 0 : i32
    return %c0_i32, %c0_i32_0 : i32, i32
  }
  func.func @transform_16(%arg0: i32) -> (i32, i32) {
    %c0_i32 = arith.constant 0 : i32
    %c0_i32_0 = arith.constant 0 : i32
    %c0_i32_1 = arith.constant 0 : i32
    return %c0_i32, %c0_i32_0 : i32, i32
  }
  func.func @transform_17(%arg0: i32) -> (i32, i32) {
    %c0_i32 = arith.constant 0 : i32
    %c0_i32_0 = arith.constant 0 : i32
    return %arg0, %c0_i32 : i32, i32
  }
  func.func @transform_18(%arg0: i32) -> (i32, i32) {
    %c0_i32 = arith.constant 0 : i32
    %c0_i32_0 = arith.constant 0 : i32
    return %arg0, %c0_i32 : i32, i32
  }
  func.func @transform_19(%arg0: i32) -> (i32, i32) {
    %c0_i32 = arith.constant 0 : i32
    %c0_i32_0 = arith.constant 0 : i32
    return %arg0, %c0_i32 : i32, i32
  }
}

</mosaic_0001>

<llo_original>
// kernel: variational_quantization_forward.1
$region0: #{variational_quantization_forward.1}
  #allocation0 [shape = 'u32[]', space=smem, size = 0x4, offset = 0x4, fixed_abs, tag = 'smem constant byte address 0x4 - core index']
  #allocation1 [shape = 'u32[72,128]{1,0:T(1,128)}', space=vmem, size = 0x9000, scoped, tag = 'internal scratch']
  %s0 = inlined_call_operand.vmem [shape: f32[16,32], index: 0, kind: input, shape index: {}]
  %s1 = inlined_call_operand.vmem [shape: f32[16,32], index: 1, kind: input, shape index: {}]
  %s2 = inlined_call_operand.hbm [shape: f32[16,32], index: 2, kind: input, shape index: {}]
  %s3 = inlined_call_operand.vmem [shape: f32[32,16], index: 3, kind: input, shape index: {}]
  %s4 = inlined_call_operand.hbm [shape: f32[1,16], index: 4, kind: input, shape index: {}]
  %s5 = inlined_call_operand.vmem [shape: f32[32,32], index: 5, kind: input, shape index: {}]
  %s6 = inlined_call_operand.hbm [shape: f32[1,32], index: 6, kind: input, shape index: {}]
  %s7 = inlined_call_operand.hbm [shape: f32[16,32], index: 7, kind: input, shape index: {}]
  %s8 = inlined_call_operand.hbm [shape: f32[1,32], index: 8, kind: input, shape index: {}]
  %s9 = inlined_call_operand.hbm [shape: f32[1,32], index: 9, kind: input, shape index: {}]
  %s10 = inlined_call_operand.hbm [shape: f32[1,32], index: 10, kind: input, shape index: {}]
  %s11 = inlined_call_operand.hbm [shape: f32[32,48], index: 11, kind: input, shape index: {}]
  %s12 = inlined_call_operand.hbm [shape: f32[1,48], index: 12, kind: input, shape index: {}]
  %s13 = inlined_call_operand.hbm [shape: f32[16,32], index: 13, kind: input, shape index: {}]
  %s14 = inlined_call_operand.hbm [shape: f32[1,32], index: 14, kind: input, shape index: {}]
  %s15 = inlined_call_operand.hbm [shape: f32[1,32], index: 15, kind: input, shape index: {}]
  %s16 = inlined_call_operand.hbm [shape: f32[1,32], index: 16, kind: input, shape index: {}]
  %s17 = inlined_call_operand.vmem [shape: f32[16,32], index: 17, kind: output, shape index: {0}]
  %s18 = inlined_call_operand.hbm [shape: f32[32,32], index: 18, kind: output, shape index: {1}]
  %s19 = inlined_call_operand.vmem [shape: f32[16,16], index: 19, kind: output, shape index: {2}]
  %20 = xla_tuple %s17, %s18, %s19
  %s21 = sld [smem:[#allocation0]]
  $region169: #{variational_quantization_forward.1} parent=0
    _
  %s23 = ssub.s32 1, %s21
  %s24 = scalar_select 0, %s23, %s21
  $region1: #{variational_quantization_forward.1} parent=0
    #allocation2 [shape = 'u8[8192]{0}', space=vmem, size = 0x2000, scoped, tag = 'input window, operand 2, single buffered']
    #allocation3 [shape = 's32[2]{0}', space=sflag, size = 0x8, scoped, tag = 'scoped memory for variational_quantization_forward.1']
    #allocation4 [shape = 's32[2]{0}', space=sflag, size = 0x8, scoped, tag = 'scoped memory for variational_quantization_forward.1']
    #allocation5 [shape = 'u8[512]{0}', space=vmem, size = 0x400, scoped, tag = 'input window, operand 4, single buffered']
    #allocation6 [shape = 's32[1]{0}', space=sflag, size = 0x4, scoped, tag = 'scoped memory for variational_quantization_forward.1']
    #allocation7 [shape = 'u8[512]{0}', space=vmem, size = 0x400, scoped, tag = 'input window, operand 6, single buffered']
    #allocation8 [shape = 'u8[8192]{0}', space=vmem, size = 0x2000, scoped, tag = 'input window, operand 7, single buffered']
    #allocation9 [shape = 's32[1]{0}', space=sflag, size = 0x4, scoped, tag = 'scoped memory for variational_quantization_forward.1']
    #allocation10 [shape = 'u8[512]{0}', space=vmem, size = 0x400, scoped, tag = 'input window, operand 8, single buffered']
    #allocation11 [shape = 'u8[512]{0}', space=vmem, size = 0x400, scoped, tag = 'input window, operand 9, single buffered']
    #allocation12 [shape = 's32[1]{0}', space=sflag, size = 0x4, scoped, tag = 'scoped memory for variational_quantization_forward.1']
    #allocation13 [shape = 'u8[512]{0}', space=vmem, size = 0x400, scoped, tag = 'input window, operand 10, single buffered']
    #allocation14 [shape = 'u8[16384]{0}', space=vmem, size = 0x4000, scoped, tag = 'input window, operand 11, single buffered']
    #allocation15 [shape = 's32[1]{0}', space=sflag, size = 0x4, scoped, tag = 'scoped memory for variational_quantization_forward.1']
    #allocation16 [shape = 'u8[512]{0}', space=vmem, size = 0x400, scoped, tag = 'input window, operand 12, single buffered']
    #allocation17 [shape = 'u8[8192]{0}', space=vmem, size = 0x2000, scoped, tag = 'input window, operand 13, single buffered']
    #allocation18 [shape = 's32[1]{0}', space=sflag, size = 0x4, scoped, tag = 'scoped memory for variational_quantization_forward.1']
    #allocation19 [shape = 'u8[512]{0}', space=vmem, size = 0x400, scoped, tag = 'input window, operand 14, single buffered']
    #allocation20 [shape = 'u8[512]{0}', space=vmem, size = 0x400, scoped, tag = 'input window, operand 15, single buffered']
    #allocation21 [shape = 's32[1]{0}', space=sflag, size = 0x4, scoped, tag = 'scoped memory for variational_quantization_forward.1']
    #allocation22 [shape = 'u8[512]{0}', space=vmem, size = 0x400, scoped, tag = 'input window, operand 16, single buffered']
    #allocation23 [shape = 'u8[16384]{0}', space=vmem, size = 0x4000, scoped, tag = 'output window, operand 1']
    %25 = vsyncpa [#allocation3], 0
    %26 = vsyncpa [#allocation6], 0
    %27 = vsyncpa [#allocation9], 0
    %28 = vsyncpa [#allocation12], 0
    %29 = vsyncpa [#allocation15], 0
    %30 = vsyncpa [#allocation18], 0
    %31 = vsyncpa [#allocation21], 0
    %32 = vsyncpa [#allocation4], 0
    %s33 = scalar_lea.sflag [#allocation4], 1
    %34 = vsyncpa %s33, 0
    loop: start=0, step=1, limit=4
    $region2: #{variational_quantization_forward.1} parent=1 // loop_pre_header
      _
    $region3: #{variational_quantization_forward.1} parent=1 // loop_header
      %s36 = sphi 0, %s40
      %p37 = scmp.ge.s32.totalorder %s36, 4
      %s46 = sphi 0, %s48
      %s49 = sphi 0, %s46
      %s50 = sphi 0, %s49
      %s66 = sphi 0, %s50
      %s72 = sphi 0, %s74
      %s75 = sphi 0, %s72
      %s76 = sphi 0, %s75
      %s92 = sphi 0, %s76
      %s96 = sphi 0, %s96
      %s98 = sphi 0, %s96
      %s99 = sphi 0, %s98
      %s113 = sphi 0, %s99
      %s117 = sphi 0, %s117
      %s119 = sphi 0, %s117
      %s120 = sphi 0, %s119
      %s134 = sphi 0, %s120
      %s138 = sphi 0, %s138
      %s140 = sphi 0, %s138
      %s141 = sphi 0, %s140
      %s155 = sphi 0, %s141
      %s159 = sphi 0, %s159
      %s161 = sphi 0, %s159
      %s162 = sphi 0, %s161
      %s176 = sphi 0, %s162
      %s180 = sphi 0, %s180
      %s182 = sphi 0, %s180
      %s183 = sphi 0, %s182
      %s197 = sphi 0, %s183
      %s201 = sphi 0, %s201
      %s203 = sphi 0, %s201
      %s204 = sphi 0, %s203
      %s218 = sphi 0, %s204
      %s222 = sphi 0, %s222
      %s224 = sphi 0, %s222
      %s225 = sphi 0, %s224
      %s239 = sphi 0, %s225
      %s243 = sphi 0, %s243
      %s245 = sphi 0, %s243
      %s246 = sphi 0, %s245
      %s260 = sphi 0, %s246
      %s264 = sphi 0, %s264
      %s266 = sphi 0, %s264
      %s267 = sphi 0, %s266
      %s281 = sphi 0, %s267
      %s285 = sphi 0, %s285
      %s287 = sphi 0, %s285
      %s288 = sphi 0, %s287
      %s302 = sphi 0, %s288
      %s306 = sphi 0, %s306
      %s308 = sphi 0, %s306
      %s309 = sphi 0, %s308
      %s323 = sphi 0, %s309
      %s327 = sphi 0, %s327
      %s329 = sphi 0, %s327
      %s330 = sphi 0, %s329
      %s344 = sphi 0, %s330
      %s348 = sphi 0, %s348
      %s350 = sphi 0, %s348
      %s351 = sphi 0, %s350
      %s365 = sphi 0, %s351
      %s369 = sphi 0, %s369
      %s371 = sphi 0, %s369
      %s372 = sphi 0, %s371
      %s386 = sphi 0, %s372
      %s390 = sphi 0, %s390
      %s392 = sphi 0, %s390
      %s393 = sphi 0, %s392
      %s407 = sphi 0, %s393
      %s413 = sphi 0, %s415
      %s416 = sphi 0, %s413
      %s417 = sphi 0, %s416
      %s433 = sphi 0, %s417
      %s439 = sphi 0, %s441
      %s442 = sphi 0, %s439
      %s443 = sphi 0, %s442
      %s459 = sphi 0, %s443
      %s465 = sphi 0, %s467
      %s468 = sphi 0, %s465
      %s469 = sphi 0, %s468
      %s485 = sphi 0, %s469
    $region4: #{variational_quantization_forward.1} parent=1 // loop_header_branch
      %39 = sbr.rel (%p37) target = $region8
    $region5: #{variational_quantization_forward.1} parent=1 // loop_body
      %s41 = ssub.s32 %s36, 1
      %s42 = ssub.s32 %s36, 2
      %s43 = sadd.s32 %s36, 1
      %s44 = ssub.s32 %s36, %s43
      %p45 = scmp.eq.s32.totalorder %s44, 0
      %s47 = sadd.s32 %s46, 1
      %s48 = scalar_select %p45, %s46, %s47
      %p51 = pneg %p45
      %p52 = scmp.eq.s32.totalorder %s36, 1
      %p53 = por %p51, %p52
      %p54 = scmp.ne.s32.totalorder %s46, %s49
      %p55 = scmp.eq.s32.totalorder %s36, 0
      %p56 = por %p54, %p55
      %p57 = scmp.ne.s32.totalorder %s46, %s49
      %p58 = scmp.eq.s32.totalorder %s41, 1
      %p59 = por %p57, %p58
      %p60 = scmp.ne.s32.totalorder %s49, %s50
      %p61 = scmp.eq.s32.totalorder %s41, 0
      %p62 = por %p60, %p61
      %p63 = scmp.ne.s32.totalorder %s49, %s50
      %p64 = scmp.eq.s32.totalorder %s42, 1
      %p65 = por %p63, %p64
      %p67 = scmp.ne.s32.totalorder %s50, %s66
      %p68 = scmp.eq.s32.totalorder %s42, 0
      %p69 = por %p67, %p68
      %s70 = ssub.s32 %s36, %s43
      %p71 = scmp.eq.s32.totalorder %s70, 0
      %s73 = sadd.s32 %s72, 1
      %s74 = scalar_select %p71, %s72, %s73
      %p77 = pneg %p71
      %p78 = scmp.eq.s32.totalorder %s36, 1
      %p79 = por %p77, %p78
      %p80 = scmp.ne.s32.totalorder %s72, %s75
      %p81 = scmp.eq.s32.totalorder %s36, 0
      %p82 = por %p80, %p81
      %p83 = scmp.ne.s32.totalorder %s72, %s75
      %p84 = scmp.eq.s32.totalorder %s41, 1
      %p85 = por %p83, %p84
      %p86 = scmp.ne.s32.totalorder %s75, %s76
      %p87 = scmp.eq.s32.totalorder %s41, 0
      %p88 = por %p86, %p87
      %p89 = scmp.ne.s32.totalorder %s75, %s76
      %p90 = scmp.eq.s32.totalorder %s42, 1
      %p91 = por %p89, %p90
      %p93 = scmp.ne.s32.totalorder %s76, %s92
      %p94 = scmp.eq.s32.totalorder %s42, 0
      %p95 = por %p93, %p94
      %s97 = sadd.s32 %s96, 1
      %p100 = scmp.eq.s32.totalorder %s36, 1
      %p101 = scmp.ne.s32.totalorder %s96, %s98
      %p102 = scmp.eq.s32.totalorder %s36, 0
      %p103 = por %p101, %p102
      %p104 = scmp.ne.s32.totalorder %s96, %s98
      %p105 = scmp.eq.s32.totalorder %s41, 1
      %p106 = por %p104, %p105
      %p107 = scmp.ne.s32.totalorder %s98, %s99
      %p108 = scmp.eq.s32.totalorder %s41, 0
      %p109 = por %p107, %p108
      %p110 = scmp.ne.s32.totalorder %s98, %s99
      %p111 = scmp.eq.s32.totalorder %s42, 1
      %p112 = por %p110, %p111
      %p114 = scmp.ne.s32.totalorder %s99, %s113
      %p115 = scmp.eq.s32.totalorder %s42, 0
      %p116 = por %p114, %p115
      %s118 = sadd.s32 %s117, 1
      %p121 = scmp.eq.s32.totalorder %s36, 1
      %p122 = scmp.ne.s32.totalorder %s117, %s119
      %p123 = scmp.eq.s32.totalorder %s36, 0
      %p124 = por %p122, %p123
      %p125 = scmp.ne.s32.totalorder %s117, %s119
      %p126 = scmp.eq.s32.totalorder %s41, 1
      %p127 = por %p125, %p126
      %p128 = scmp.ne.s32.totalorder %s119, %s120
      %p129 = scmp.eq.s32.totalorder %s41, 0
      %p130 = por %p128, %p129
      %p131 = scmp.ne.s32.totalorder %s119, %s120
      %p132 = scmp.eq.s32.totalorder %s42, 1
      %p133 = por %p131, %p132
      %p135 = scmp.ne.s32.totalorder %s120, %s134
      %p136 = scmp.eq.s32.totalorder %s42, 0
      %p137 = por %p135, %p136
      %s139 = sadd.s32 %s138, 1
      %p142 = scmp.eq.s32.totalorder %s36, 1
      %p143 = scmp.ne.s32.totalorder %s138, %s140
      %p144 = scmp.eq.s32.totalorder %s36, 0
      %p145 = por %p143, %p144
      %p146 = scmp.ne.s32.totalorder %s138, %s140
      %p147 = scmp.eq.s32.totalorder %s41, 1
      %p148 = por %p146, %p147
      %p149 = scmp.ne.s32.totalorder %s140, %s141
      %p150 = scmp.eq.s32.totalorder %s41, 0
      %p151 = por %p149, %p150
      %p152 = scmp.ne.s32.totalorder %s140, %s141
      %p153 = scmp.eq.s32.totalorder %s42, 1
      %p154 = por %p152, %p153
      %p156 = scmp.ne.s32.totalorder %s141, %s155
      %p157 = scmp.eq.s32.totalorder %s42, 0
      %p158 = por %p156, %p157
      %s160 = sadd.s32 %s159, 1
      %p163 = scmp.eq.s32.totalorder %s36, 1
      %p164 = scmp.ne.s32.totalorder %s159, %s161
      %p165 = scmp.eq.s32.totalorder %s36, 0
      %p166 = por %p164, %p165
      %p167 = scmp.ne.s32.totalorder %s159, %s161
      %p168 = scmp.eq.s32.totalorder %s41, 1
      %p169 = por %p167, %p168
      %p170 = scmp.ne.s32.totalorder %s161, %s162
      %p171 = scmp.eq.s32.totalorder %s41, 0
      %p172 = por %p170, %p171
      %p173 = scmp.ne.s32.totalorder %s161, %s162
      %p174 = scmp.eq.s32.totalorder %s42, 1
      %p175 = por %p173, %p174
      %p177 = scmp.ne.s32.totalorder %s162, %s176
      %p178 = scmp.eq.s32.totalorder %s42, 0
      %p179 = por %p177, %p178
      %s181 = sadd.s32 %s180, 1
      %p184 = scmp.eq.s32.totalorder %s36, 1
      %p185 = scmp.ne.s32.totalorder %s180, %s182
      %p186 = scmp.eq.s32.totalorder %s36, 0
      %p187 = por %p185, %p186
      %p188 = scmp.ne.s32.totalorder %s180, %s182
      %p189 = scmp.eq.s32.totalorder %s41, 1
      %p190 = por %p188, %p189
      %p191 = scmp.ne.s32.totalorder %s182, %s183
      %p192 = scmp.eq.s32.totalorder %s41, 0
      %p193 = por %p191, %p192
      %p194 = scmp.ne.s32.totalorder %s182, %s183
      %p195 = scmp.eq.s32.totalorder %s42, 1
      %p196 = por %p194, %p195
      %p198 = scmp.ne.s32.totalorder %s183, %s197
      %p199 = scmp.eq.s32.totalorder %s42, 0
      %p200 = por %p198, %p199
      %s202 = sadd.s32 %s201, 1
      %p205 = scmp.eq.s32.totalorder %s36, 1
      %p206 = scmp.ne.s32.totalorder %s201, %s203
      %p207 = scmp.eq.s32.totalorder %s36, 0
      %p208 = por %p206, %p207
      %p209 = scmp.ne.s32.totalorder %s201, %s203
      %p210 = scmp.eq.s32.totalorder %s41, 1
      %p211 = por %p209, %p210
      %p212 = scmp.ne.s32.totalorder %s203, %s204
      %p213 = scmp.eq.s32.totalorder %s41, 0
      %p214 = por %p212, %p213
      %p215 = scmp.ne.s32.totalorder %s203, %s204
      %p216 = scmp.eq.s32.totalorder %s42, 1
      %p217 = por %p215, %p216
      %p219 = scmp.ne.s32.totalorder %s204, %s218
      %p220 = scmp.eq.s32.totalorder %s42, 0
      %p221 = por %p219, %p220
      %s223 = sadd.s32 %s222, 1
      %p226 = scmp.eq.s32.totalorder %s36, 1
      %p227 = scmp.ne.s32.totalorder %s222, %s224
      %p228 = scmp.eq.s32.totalorder %s36, 0
      %p229 = por %p227, %p228
      %p230 = scmp.ne.s32.totalorder %s222, %s224
      %p231 = scmp.eq.s32.totalorder %s41, 1
      %p232 = por %p230, %p231
      %p233 = scmp.ne.s32.totalorder %s224, %s225
      %p234 = scmp.eq.s32.totalorder %s41, 0
      %p235 = por %p233, %p234
      %p236 = scmp.ne.s32.totalorder %s224, %s225
      %p237 = scmp.eq.s32.totalorder %s42, 1
      %p238 = por %p236, %p237
      %p240 = scmp.ne.s32.totalorder %s225, %s239
      %p241 = scmp.eq.s32.totalorder %s42, 0
      %p242 = por %p240, %p241
      %s244 = sadd.s32 %s243, 1
      %p247 = scmp.eq.s32.totalorder %s36, 1
      %p248 = scmp.ne.s32.totalorder %s243, %s245
      %p249 = scmp.eq.s32.totalorder %s36, 0
      %p250 = por %p248, %p249
      %p251 = scmp.ne.s32.totalorder %s243, %s245
      %p252 = scmp.eq.s32.totalorder %s41, 1
      %p253 = por %p251, %p252
      %p254 = scmp.ne.s32.totalorder %s245, %s246
      %p255 = scmp.eq.s32.totalorder %s41, 0
      %p256 = por %p254, %p255
      %p257 = scmp.ne.s32.totalorder %s245, %s246
      %p258 = scmp.eq.s32.totalorder %s42, 1
      %p259 = por %p257, %p258
      %p261 = scmp.ne.s32.totalorder %s246, %s260
      %p262 = scmp.eq.s32.totalorder %s42, 0
      %p263 = por %p261, %p262
      %s265 = sadd.s32 %s264, 1
      %p268 = scmp.eq.s32.totalorder %s36, 1
      %p269 = scmp.ne.s32.totalorder %s264, %s266
      %p270 = scmp.eq.s32.totalorder %s36, 0
      %p271 = por %p269, %p270
      %p272 = scmp.ne.s32.totalorder %s264, %s266
      %p273 = scmp.eq.s32.totalorder %s41, 1
      %p274 = por %p272, %p273
      %p275 = scmp.ne.s32.totalorder %s266, %s267
      %p276 = scmp.eq.s32.totalorder %s41, 0
      %p277 = por %p275, %p276
      %p278 = scmp.ne.s32.totalorder %s266, %s267
      %p279 = scmp.eq.s32.totalorder %s42, 1
      %p280 = por %p278, %p279
      %p282 = scmp.ne.s32.totalorder %s267, %s281
      %p283 = scmp.eq.s32.totalorder %s42, 0
      %p284 = por %p282, %p283
      %s286 = sadd.s32 %s285, 1
      %p289 = scmp.eq.s32.totalorder %s36, 1
      %p290 = scmp.ne.s32.totalorder %s285, %s287
      %p291 = scmp.eq.s32.totalorder %s36, 0
      %p292 = por %p290, %p291
      %p293 = scmp.ne.s32.totalorder %s285, %s287
      %p294 = scmp.eq.s32.totalorder %s41, 1
      %p295 = por %p293, %p294
      %p296 = scmp.ne.s32.totalorder %s287, %s288
      %p297 = scmp.eq.s32.totalorder %s41, 0
      %p298 = por %p296, %p297
      %p299 = scmp.ne.s32.totalorder %s287, %s288
      %p300 = scmp.eq.s32.totalorder %s42, 1
      %p301 = por %p299, %p300
      %p303 = scmp.ne.s32.totalorder %s288, %s302
      %p304 = scmp.eq.s32.totalorder %s42, 0
      %p305 = por %p303, %p304
      %s307 = sadd.s32 %s306, 1
      %p310 = scmp.eq.s32.totalorder %s36, 1
      %p311 = scmp.ne.s32.totalorder %s306, %s308
      %p312 = scmp.eq.s32.totalorder %s36, 0
      %p313 = por %p311, %p312
      %p314 = scmp.ne.s32.totalorder %s306, %s308
      %p315 = scmp.eq.s32.totalorder %s41, 1
      %p316 = por %p314, %p315
      %p317 = scmp.ne.s32.totalorder %s308, %s309
      %p318 = scmp.eq.s32.totalorder %s41, 0
      %p319 = por %p317, %p318
      %p320 = scmp.ne.s32.totalorder %s308, %s309
      %p321 = scmp.eq.s32.totalorder %s42, 1
      %p322 = por %p320, %p321
      %p324 = scmp.ne.s32.totalorder %s309, %s323
      %p325 = scmp.eq.s32.totalorder %s42, 0
      %p326 = por %p324, %p325
      %s328 = sadd.s32 %s327, 1
      %p331 = scmp.eq.s32.totalorder %s36, 1
      %p332 = scmp.ne.s32.totalorder %s327, %s329
      %p333 = scmp.eq.s32.totalorder %s36, 0
      %p334 = por %p332, %p333
      %p335 = scmp.ne.s32.totalorder %s327, %s329
      %p336 = scmp.eq.s32.totalorder %s41, 1
      %p337 = por %p335, %p336
      %p338 = scmp.ne.s32.totalorder %s329, %s330
      %p339 = scmp.eq.s32.totalorder %s41, 0
      %p340 = por %p338, %p339
      %p341 = scmp.ne.s32.totalorder %s329, %s330
      %p342 = scmp.eq.s32.totalorder %s42, 1
      %p343 = por %p341, %p342
      %p345 = scmp.ne.s32.totalorder %s330, %s344
      %p346 = scmp.eq.s32.totalorder %s42, 0
      %p347 = por %p345, %p346
      %s349 = sadd.s32 %s348, 1
      %p352 = scmp.eq.s32.totalorder %s36, 1
      %p353 = scmp.ne.s32.totalorder %s348, %s350
      %p354 = scmp.eq.s32.totalorder %s36, 0
      %p355 = por %p353, %p354
      %p356 = scmp.ne.s32.totalorder %s348, %s350
      %p357 = scmp.eq.s32.totalorder %s41, 1
      %p358 = por %p356, %p357
      %p359 = scmp.ne.s32.totalorder %s350, %s351
      %p360 = scmp.eq.s32.totalorder %s41, 0
      %p361 = por %p359, %p360
      %p362 = scmp.ne.s32.totalorder %s350, %s351
      %p363 = scmp.eq.s32.totalorder %s42, 1
      %p364 = por %p362, %p363
      %p366 = scmp.ne.s32.totalorder %s351, %s365
      %p367 = scmp.eq.s32.totalorder %s42, 0
      %p368 = por %p366, %p367
      %s370 = sadd.s32 %s369, 1
      %p373 = scmp.eq.s32.totalorder %s36, 1
      %p374 = scmp.ne.s32.totalorder %s369, %s371
      %p375 = scmp.eq.s32.totalorder %s36, 0
      %p376 = por %p374, %p375
      %p377 = scmp.ne.s32.totalorder %s369, %s371
      %p378 = scmp.eq.s32.totalorder %s41, 1
      %p379 = por %p377, %p378
      %p380 = scmp.ne.s32.totalorder %s371, %s372
      %p381 = scmp.eq.s32.totalorder %s41, 0
      %p382 = por %p380, %p381
      %p383 = scmp.ne.s32.totalorder %s371, %s372
      %p384 = scmp.eq.s32.totalorder %s42, 1
      %p385 = por %p383, %p384
      %p387 = scmp.ne.s32.totalorder %s372, %s386
      %p388 = scmp.eq.s32.totalorder %s42, 0
      %p389 = por %p387, %p388
      %s391 = sadd.s32 %s390, 1
      %p394 = scmp.eq.s32.totalorder %s36, 1
      %p395 = scmp.ne.s32.totalorder %s390, %s392
      %p396 = scmp.eq.s32.totalorder %s36, 0
      %p397 = por %p395, %p396
      %p398 = scmp.ne.s32.totalorder %s390, %s392
      %p399 = scmp.eq.s32.totalorder %s41, 1
      %p400 = por %p398, %p399
      %p401 = scmp.ne.s32.totalorder %s392, %s393
      %p402 = scmp.eq.s32.totalorder %s41, 0
      %p403 = por %p401, %p402
      %p404 = scmp.ne.s32.totalorder %s392, %s393
      %p405 = scmp.eq.s32.totalorder %s42, 1
      %p406 = por %p404, %p405
      %p408 = scmp.ne.s32.totalorder %s393, %s407
      %p409 = scmp.eq.s32.totalorder %s42, 0
      %p410 = por %p408, %p409
      %s411 = ssub.s32 %s36, %s43
      %p412 = scmp.eq.s32.totalorder %s411, 0
      %s414 = sadd.s32 %s413, 1
      %s415 = scalar_select %p412, %s413, %s414
      %p418 = pneg %p412
      %p419 = scmp.eq.s32.totalorder %s36, 1
      %p420 = por %p418, %p419
      %p421 = scmp.ne.s32.totalorder %s413, %s416
      %p422 = scmp.eq.s32.totalorder %s36, 0
      %p423 = por %p421, %p422
      %p424 = scmp.ne.s32.totalorder %s413, %s416
      %p425 = scmp.eq.s32.totalorder %s41, 1
      %p426 = por %p424, %p425
      %p427 = scmp.ne.s32.totalorder %s416, %s417
      %p428 = scmp.eq.s32.totalorder %s41, 0
      %p429 = por %p427, %p428
      %p430 = scmp.ne.s32.totalorder %s416, %s417
      %p431 = scmp.eq.s32.totalorder %s42, 1
      %p432 = por %p430, %p431
      %p434 = scmp.ne.s32.totalorder %s417, %s433
      %p435 = scmp.eq.s32.totalorder %s42, 0
      %p436 = por %p434, %p435
      %s437 = ssub.s32 %s36, %s43
      %p438 = scmp.eq.s32.totalorder %s437, 0
      %s440 = sadd.s32 %s439, 1
      %s441 = scalar_select %p438, %s439, %s440
      %p444 = pneg %p438
      %p445 = scmp.eq.s32.totalorder %s36, 1
      %p446 = por %p444, %p445
      %p447 = scmp.ne.s32.totalorder %s439, %s442
      %p448 = scmp.eq.s32.totalorder %s36, 0
      %p449 = por %p447, %p448
      %p450 = scmp.ne.s32.totalorder %s439, %s442
      %p451 = scmp.eq.s32.totalorder %s41, 1
      %p452 = por %p450, %p451
      %p453 = scmp.ne.s32.totalorder %s442, %s443
      %p454 = scmp.eq.s32.totalorder %s41, 0
      %p455 = por %p453, %p454
      %p456 = scmp.ne.s32.totalorder %s442, %s443
      %p457 = scmp.eq.s32.totalorder %s42, 1
      %p458 = por %p456, %p457
      %p460 = scmp.ne.s32.totalorder %s443, %s459
      %p461 = scmp.eq.s32.totalorder %s42, 0
      %p462 = por %p460, %p461
      %s463 = ssub.s32 %s36, %s43
      %p464 = scmp.eq.s32.totalorder %s463, 0
      %s466 = sadd.s32 %s465, 1
      %s467 = scalar_select %p464, %s465, %s466
      %p470 = pneg %p464
      %p471 = scmp.eq.s32.totalorder %s36, 1
      %p472 = por %p470, %p471
      %p473 = scmp.ne.s32.totalorder %s465, %s468
      %p474 = scmp.eq.s32.totalorder %s36, 0
      %p475 = por %p473, %p474
      %p476 = scmp.ne.s32.totalorder %s465, %s468
      %p477 = scmp.eq.s32.totalorder %s41, 1
      %p478 = por %p476, %p477
      %p479 = scmp.ne.s32.totalorder %s468, %s469
      %p480 = scmp.eq.s32.totalorder %s41, 0
      %p481 = por %p479, %p480
      %p482 = scmp.ne.s32.totalorder %s468, %s469
      %p483 = scmp.eq.s32.totalorder %s42, 1
      %p484 = por %p482, %p483
      %p486 = scmp.ne.s32.totalorder %s469, %s485
      %p487 = scmp.eq.s32.totalorder %s42, 0
      %p488 = por %p486, %p487
      %p489 = scmp.le.s32.totalorder 1, %s36
      %p490 = scmp.lt.s32.totalorder %s36, 3
      %p491 = pnand %p489, %p490
      %p492 = pneg %p491
      // Predicated region
      $region9: #{variational_quantization_forward.1} parent=5 // pred_check
        _
      $region10: #{variational_quantization_forward.1} parent=5 // pred_check_branch
        %494 = sbr.rel (%p491) target = $region12
      $region11: #{variational_quantization_forward.1} parent=5 // pred_region
        %s495 = ssub.s32 %s36, 1
        // Predicated region
        $region13: #{variational_quantization_forward.1} parent=11 // pred_check
          %p496 = pneg %p109
        $region14: #{variational_quantization_forward.1} parent=11 // pred_check_branch
          %498 = sbr.rel (%p496) target = $region16
        $region15: #{variational_quantization_forward.1} parent=11 // pred_region
          %500 = vsyncadd [#allocation3], 0
          %s501 = sshll.u32 %s2, 4
          %s502 = int_to_ptr.hbm [resolvable:$true] %s501
          %s503 = sshll.u32 [#allocation2], 4
          %s504 = int_to_ptr.vmem [resolvable:$true] %s503
          %509 = dma.hbm_to_vmem [thread:$0]  %s502, 256, %s504, [#allocation3], 128, 128, 8
        $region16: #{variational_quantization_forward.1} parent=11 // pred_fallthru
          _
        // Predicated region
        $region17: #{variational_quantization_forward.1} parent=11 // pred_check
          %p510 = pneg %p130
        $region18: #{variational_quantization_forward.1} parent=11 // pred_check_branch
          %512 = sbr.rel (%p510) target = $region20
        $region19: #{variational_quantization_forward.1} parent=11 // pred_region
          _
        $region20: #{variational_quantization_forward.1} parent=11 // pred_fallthru
          _
        // Predicated region
        $region21: #{variational_quantization_forward.1} parent=11 // pred_check
          %p513 = pneg %p151
        $region22: #{variational_quantization_forward.1} parent=11 // pred_check_branch
          %515 = sbr.rel (%p513) target = $region24
        $region23: #{variational_quantization_forward.1} parent=11 // pred_region
          %517 = vsyncadd [#allocation6], 0
          %s519 = sshll.u32 %s4, 4
          %s520 = int_to_ptr.hbm [resolvable:$true] %s519
          %s521 = sshll.u32 [#allocation5], 4
          %s522 = int_to_ptr.vmem [resolvable:$true] %s521
          %524 = dma.hbm_to_vmem [thread:$0]  %s520, 16, %s522, [#allocation6]
        $region24: #{variational_quantization_forward.1} parent=11 // pred_fallthru
          _
        // Predicated region
        $region25: #{variational_quantization_forward.1} parent=11 // pred_check
          %p525 = pneg %p172
        $region26: #{variational_quantization_forward.1} parent=11 // pred_check_branch
          %527 = sbr.rel (%p525) target = $region28
        $region27: #{variational_quantization_forward.1} parent=11 // pred_region
          _
        $region28: #{variational_quantization_forward.1} parent=11 // pred_fallthru
          _
        // Predicated region
        $region29: #{variational_quantization_forward.1} parent=11 // pred_check
          %p528 = pneg %p193
        $region30: #{variational_quantization_forward.1} parent=11 // pred_check_branch
          %530 = sbr.rel (%p528) target = $region32
        $region31: #{variational_quantization_forward.1} parent=11 // pred_region
          %532 = vsyncadd [#allocation6], 0
          %s534 = sshll.u32 %s6, 4
          %s535 = int_to_ptr.hbm [resolvable:$true] %s534
          %s536 = sshll.u32 [#allocation7], 4
          %s537 = int_to_ptr.vmem [resolvable:$true] %s536
          %539 = dma.hbm_to_vmem [thread:$0]  %s535, 16, %s537, [#allocation6]
        $region32: #{variational_quantization_forward.1} parent=11 // pred_fallthru
          _
        // Predicated region
        $region33: #{variational_quantization_forward.1} parent=11 // pred_check
          %p540 = pneg %p214
        $region34: #{variational_quantization_forward.1} parent=11 // pred_check_branch
          %542 = sbr.rel (%p540) target = $region36
        $region35: #{variational_quantization_forward.1} parent=11 // pred_region
          %544 = vsyncadd [#allocation9], 0
          %s545 = sshll.u32 %s7, 4
          %s546 = int_to_ptr.hbm [resolvable:$true] %s545
          %s547 = sshll.u32 [#allocation8], 4
          %s548 = int_to_ptr.vmem [resolvable:$true] %s547
          %553 = dma.hbm_to_vmem [thread:$0]  %s546, 256, %s548, [#allocation9], 128, 128, 8
        $region36: #{variational_quantization_forward.1} parent=11 // pred_fallthru
          _
        // Predicated region
        $region37: #{variational_quantization_forward.1} parent=11 // pred_check
          %p554 = pneg %p235
        $region38: #{variational_quantization_forward.1} parent=11 // pred_check_branch
          %556 = sbr.rel (%p554) target = $region40
        $region39: #{variational_quantization_forward.1} parent=11 // pred_region
          %558 = vsyncadd [#allocation9], 0
          %s560 = sshll.u32 %s8, 4
          %s561 = int_to_ptr.hbm [resolvable:$true] %s560
          %s562 = sshll.u32 [#allocation10], 4
          %s563 = int_to_ptr.vmem [resolvable:$true] %s562
          %565 = dma.hbm_to_vmem [thread:$0]  %s561, 16, %s563, [#allocation9]
        $region40: #{variational_quantization_forward.1} parent=11 // pred_fallthru
          _
        // Predicated region
        $region41: #{variational_quantization_forward.1} parent=11 // pred_check
          %p566 = pneg %p256
        $region42: #{variational_quantization_forward.1} parent=11 // pred_check_branch
          %568 = sbr.rel (%p566) target = $region44
        $region43: #{variational_quantization_forward.1} parent=11 // pred_region
          %570 = vsyncadd [#allocation12], 0
          %s572 = sshll.u32 %s9, 4
          %s573 = int_to_ptr.hbm [resolvable:$true] %s572
          %s574 = sshll.u32 [#allocation11], 4
          %s575 = int_to_ptr.vmem [resolvable:$true] %s574
          %577 = dma.hbm_to_vmem [thread:$0]  %s573, 16, %s575, [#allocation12]
        $region44: #{variational_quantization_forward.1} parent=11 // pred_fallthru
          _
        // Predicated region
        $region45: #{variational_quantization_forward.1} parent=11 // pred_check
          %p578 = pneg %p277
        $region46: #{variational_quantization_forward.1} parent=11 // pred_check_branch
          %580 = sbr.rel (%p578) target = $region48
        $region47: #{variational_quantization_forward.1} parent=11 // pred_region
          %582 = vsyncadd [#allocation12], 0
          %s584 = sshll.u32 %s10, 4
          %s585 = int_to_ptr.hbm [resolvable:$true] %s584
          %s586 = sshll.u32 [#allocation13], 4
          %s587 = int_to_ptr.vmem [resolvable:$true] %s586
          %589 = dma.hbm_to_vmem [thread:$0]  %s585, 16, %s587, [#allocation12]
        $region48: #{variational_quantization_forward.1} parent=11 // pred_fallthru
          _
        // Predicated region
        $region49: #{variational_quantization_forward.1} parent=11 // pred_check
          %p590 = pneg %p298
        $region50: #{variational_quantization_forward.1} parent=11 // pred_check_branch
          %592 = sbr.rel (%p590) target = $region52
        $region51: #{variational_quantization_forward.1} parent=11 // pred_region
          %594 = vsyncadd [#allocation15], 0
          %s595 = sshll.u32 %s11, 4
          %s596 = int_to_ptr.hbm [resolvable:$true] %s595
          %s597 = sshll.u32 [#allocation14], 4
          %s598 = int_to_ptr.vmem [resolvable:$true] %s597
          %603 = dma.hbm_to_vmem [thread:$0]  %s596, 512, %s598, [#allocation15], 128, 128, 8
        $region52: #{variational_quantization_forward.1} parent=11 // pred_fallthru
          _
        // Predicated region
        $region53: #{variational_quantization_forward.1} parent=11 // pred_check
          %p604 = pneg %p319
        $region54: #{variational_quantization_forward.1} parent=11 // pred_check_branch
          %606 = sbr.rel (%p604) target = $region56
        $region55: #{variational_quantization_forward.1} parent=11 // pred_region
          %608 = vsyncadd [#allocation15], 0
          %s610 = sshll.u32 %s12, 4
          %s611 = int_to_ptr.hbm [resolvable:$true] %s610
          %s612 = sshll.u32 [#allocation16], 4
          %s613 = int_to_ptr.vmem [resolvable:$true] %s612
          %615 = dma.hbm_to_vmem [thread:$0]  %s611, 16, %s613, [#allocation15]
        $region56: #{variational_quantization_forward.1} parent=11 // pred_fallthru
          _
        // Predicated region
        $region57: #{variational_quantization_forward.1} parent=11 // pred_check
          %p616 = pneg %p340
        $region58: #{variational_quantization_forward.1} parent=11 // pred_check_branch
          %618 = sbr.rel (%p616) target = $region60
        $region59: #{variational_quantization_forward.1} parent=11 // pred_region
          %620 = vsyncadd [#allocation18], 0
          %s621 = sshll.u32 %s13, 4
          %s622 = int_to_ptr.hbm [resolvable:$true] %s621
          %s623 = sshll.u32 [#allocation17], 4
          %s624 = int_to_ptr.vmem [resolvable:$true] %s623
          %629 = dma.hbm_to_vmem [thread:$0]  %s622, 256, %s624, [#allocation18], 128, 128, 8
        $region60: #{variational_quantization_forward.1} parent=11 // pred_fallthru
          _
        // Predicated region
        $region61: #{variational_quantization_forward.1} parent=11 // pred_check
          %p630 = pneg %p361
        $region62: #{variational_quantization_forward.1} parent=11 // pred_check_branch
          %632 = sbr.rel (%p630) target = $region64
        $region63: #{variational_quantization_forward.1} parent=11 // pred_region
          %634 = vsyncadd [#allocation18], 0
          %s636 = sshll.u32 %s14, 4
          %s637 = int_to_ptr.hbm [resolvable:$true] %s636
          %s638 = sshll.u32 [#allocation19], 4
          %s639 = int_to_ptr.vmem [resolvable:$true] %s638
          %641 = dma.hbm_to_vmem [thread:$0]  %s637, 16, %s639, [#allocation18]
        $region64: #{variational_quantization_forward.1} parent=11 // pred_fallthru
          _
        // Predicated region
        $region65: #{variational_quantization_forward.1} parent=11 // pred_check
          %p642 = pneg %p382
        $region66: #{variational_quantization_forward.1} parent=11 // pred_check_branch
          %644 = sbr.rel (%p642) target = $region68
        $region67: #{variational_quantization_forward.1} parent=11 // pred_region
          %646 = vsyncadd [#allocation21], 0
          %s648 = sshll.u32 %s15, 4
          %s649 = int_to_ptr.hbm [resolvable:$true] %s648
          %s650 = sshll.u32 [#allocation20], 4
          %s651 = int_to_ptr.vmem [resolvable:$true] %s650
          %653 = dma.hbm_to_vmem [thread:$0]  %s649, 16, %s651, [#allocation21]
        $region68: #{variational_quantization_forward.1} parent=11 // pred_fallthru
          _
        // Predicated region
        $region69: #{variational_quantization_forward.1} parent=11 // pred_check
          %p654 = pneg %p403
        $region70: #{variational_quantization_forward.1} parent=11 // pred_check_branch
          %656 = sbr.rel (%p654) target = $region72
        $region71: #{variational_quantization_forward.1} parent=11 // pred_region
          %658 = vsyncadd [#allocation21], 0
          %s660 = sshll.u32 %s16, 4
          %s661 = int_to_ptr.hbm [resolvable:$true] %s660
          %s662 = sshll.u32 [#allocation22], 4
          %s663 = int_to_ptr.vmem [resolvable:$true] %s662
          %665 = dma.hbm_to_vmem [thread:$0]  %s661, 16, %s663, [#allocation21]
        $region72: #{variational_quantization_forward.1} parent=11 // pred_fallthru
          _
      $region12: #{variational_quantization_forward.1} parent=5 // pred_fallthru
        _
      %p666 = scmp.lt.s32.totalorder %s36, 2
      // Predicated region
      $region73: #{variational_quantization_forward.1} parent=5 // pred_check
        %p667 = pneg %p666
      $region74: #{variational_quantization_forward.1} parent=5 // pred_check_branch
        %669 = sbr.rel (%p667) target = $region76
      $region75: #{variational_quantization_forward.1} parent=5 // pred_region
        // Predicated region
        $region77: #{variational_quantization_forward.1} parent=75 // pred_check
          %p670 = pneg %p56
        $region78: #{variational_quantization_forward.1} parent=75 // pred_check_branch
          %672 = sbr.rel (%p670) target = $region80
        $region79: #{variational_quantization_forward.1} parent=75 // pred_region
          %p673 = scmp.lt.s32.totalorder %s36, 1
          %s674 = scalar_select %p673, %s36, 1
          %s675 = smul.addr %s674, 8
          %s676 = scalar_lea.vmem %s0, %s675
        $region80: #{variational_quantization_forward.1} parent=75 // pred_fallthru
          _
        // Predicated region
        $region81: #{variational_quantization_forward.1} parent=75 // pred_check
          %p677 = pneg %p82
        $region82: #{variational_quantization_forward.1} parent=75 // pred_check_branch
          %679 = sbr.rel (%p677) target = $region84
        $region83: #{variational_quantization_forward.1} parent=75 // pred_region
          %p680 = scmp.lt.s32.totalorder %s36, 1
          %s681 = scalar_select %p680, %s36, 1
          %s682 = smul.addr %s681, 8
          %s683 = scalar_lea.vmem %s1, %s682
        $region84: #{variational_quantization_forward.1} parent=75 // pred_fallthru
          _
      $region76: #{variational_quantization_forward.1} parent=5 // pred_fallthru
        _
      %p684 = scmp.le.s32.totalorder 1, %s36
      %p685 = scmp.lt.s32.totalorder %s36, 3
      %p686 = pnand %p684, %p685
      %p687 = pneg %p686
      // Predicated region
      $region85: #{variational_quantization_forward.1} parent=5 // pred_check
        _
      $region86: #{variational_quantization_forward.1} parent=5 // pred_check_branch
        %689 = sbr.rel (%p686) target = $region88
      $region87: #{variational_quantization_forward.1} parent=5 // pred_region
        %s690 = ssub.s32 %s36, 1
        // Predicated region
        $region89: #{variational_quantization_forward.1} parent=87 // pred_check
          %p691 = pneg %p109
        $region90: #{variational_quantization_forward.1} parent=87 // pred_check_branch
          %693 = sbr.rel (%p691) target = $region92
        $region91: #{variational_quantization_forward.1} parent=87 // pred_region
          %695 = dma.done [#allocation3], 256
        $region92: #{variational_quantization_forward.1} parent=87 // pred_fallthru
          _
        // Predicated region
        $region93: #{variational_quantization_forward.1} parent=87 // pred_check
          %p696 = pneg %p151
        $region94: #{variational_quantization_forward.1} parent=87 // pred_check_branch
          %698 = sbr.rel (%p696) target = $region96
        $region95: #{variational_quantization_forward.1} parent=87 // pred_region
          %700 = dma.done [#allocation6], 16
        $region96: #{variational_quantization_forward.1} parent=87 // pred_fallthru
          _
        // Predicated region
        $region97: #{variational_quantization_forward.1} parent=87 // pred_check
          %p701 = pneg %p193
        $region98: #{variational_quantization_forward.1} parent=87 // pred_check_branch
          %703 = sbr.rel (%p701) target = $region100
        $region99: #{variational_quantization_forward.1} parent=87 // pred_region
          %705 = dma.done [#allocation6], 16
        $region100: #{variational_quantization_forward.1} parent=87 // pred_fallthru
          _
        // Predicated region
        $region101: #{variational_quantization_forward.1} parent=87 // pred_check
          %p706 = pneg %p214
        $region102: #{variational_quantization_forward.1} parent=87 // pred_check_branch
          %708 = sbr.rel (%p706) target = $region104
        $region103: #{variational_quantization_forward.1} parent=87 // pred_region
          %710 = dma.done [#allocation9], 256
        $region104: #{variational_quantization_forward.1} parent=87 // pred_fallthru
          _
        // Predicated region
        $region105: #{variational_quantization_forward.1} parent=87 // pred_check
          %p711 = pneg %p235
        $region106: #{variational_quantization_forward.1} parent=87 // pred_check_branch
          %713 = sbr.rel (%p711) target = $region108
        $region107: #{variational_quantization_forward.1} parent=87 // pred_region
          %715 = dma.done [#allocation9], 16
        $region108: #{variational_quantization_forward.1} parent=87 // pred_fallthru
          _
        // Predicated region
        $region109: #{variational_quantization_forward.1} parent=87 // pred_check
          %p716 = pneg %p256
        $region110: #{variational_quantization_forward.1} parent=87 // pred_check_branch
          %718 = sbr.rel (%p716) target = $region112
        $region111: #{variational_quantization_forward.1} parent=87 // pred_region
          %720 = dma.done [#allocation12], 16
        $region112: #{variational_quantization_forward.1} parent=87 // pred_fallthru
          _
        // Predicated region
        $region113: #{variational_quantization_forward.1} parent=87 // pred_check
          %p721 = pneg %p277
        $region114: #{variational_quantization_forward.1} parent=87 // pred_check_branch
          %723 = sbr.rel (%p721) target = $region116
        $region115: #{variational_quantization_forward.1} parent=87 // pred_region
          %725 = dma.done [#allocation12], 16
        $region116: #{variational_quantization_forward.1} parent=87 // pred_fallthru
          _
        // Predicated region
        $region117: #{variational_quantization_forward.1} parent=87 // pred_check
          %p726 = pneg %p298
        $region118: #{variational_quantization_forward.1} parent=87 // pred_check_branch
          %728 = sbr.rel (%p726) target = $region120
        $region119: #{variational_quantization_forward.1} parent=87 // pred_region
          %730 = dma.done [#allocation15], 512
        $region120: #{variational_quantization_forward.1} parent=87 // pred_fallthru
          _
        // Predicated region
        $region121: #{variational_quantization_forward.1} parent=87 // pred_check
          %p731 = pneg %p319
        $region122: #{variational_quantization_forward.1} parent=87 // pred_check_branch
          %733 = sbr.rel (%p731) target = $region124
        $region123: #{variational_quantization_forward.1} parent=87 // pred_region
          %735 = dma.done [#allocation15], 16
        $region124: #{variational_quantization_forward.1} parent=87 // pred_fallthru
          _
        // Predicated region
        $region125: #{variational_quantization_forward.1} parent=87 // pred_check
          %p736 = pneg %p340
        $region126: #{variational_quantization_forward.1} parent=87 // pred_check_branch
          %738 = sbr.rel (%p736) target = $region128
        $region127: #{variational_quantization_forward.1} parent=87 // pred_region
          %740 = dma.done [#allocation18], 256
        $region128: #{variational_quantization_forward.1} parent=87 // pred_fallthru
          _
        // Predicated region
        $region129: #{variational_quantization_forward.1} parent=87 // pred_check
          %p741 = pneg %p361
        $region130: #{variational_quantization_forward.1} parent=87 // pred_check_branch
          %743 = sbr.rel (%p741) target = $region132
        $region131: #{variational_quantization_forward.1} parent=87 // pred_region
          %745 = dma.done [#allocation18], 16
        $region132: #{variational_quantization_forward.1} parent=87 // pred_fallthru
          _
        // Predicated region
        $region133: #{variational_quantization_forward.1} parent=87 // pred_check
          %p746 = pneg %p382
        $region134: #{variational_quantization_forward.1} parent=87 // pred_check_branch
          %748 = sbr.rel (%p746) target = $region136
        $region135: #{variational_quantization_forward.1} parent=87 // pred_region
          %750 = dma.done [#allocation21], 16
        $region136: #{variational_quantization_forward.1} parent=87 // pred_fallthru
          _
        // Predicated region
        $region137: #{variational_quantization_forward.1} parent=87 // pred_check
          %p751 = pneg %p403
        $region138: #{variational_quantization_forward.1} parent=87 // pred_check_branch
          %753 = sbr.rel (%p751) target = $region140
        $region139: #{variational_quantization_forward.1} parent=87 // pred_region
          %755 = dma.done [#allocation21], 16
        $region140: #{variational_quantization_forward.1} parent=87 // pred_fallthru
          _
        %p756 = scmp.lt.s32.totalorder %s41, 1
        %s757 = scalar_select %p756, %s41, 1
        %s758 = smul.addr %s757, 8
        %s759 = scalar_lea.vmem %s0, %s758
        %p760 = pneg %p62
        %p761 = pneg %p59
        %p762 = scmp.lt.s32.totalorder %s41, 1
        %s763 = scalar_select %p762, %s41, 1
        %s764 = smul.addr %s763, 8
        %s765 = scalar_lea.vmem %s1, %s764
        %p766 = pneg %p88
        %p767 = pneg %p85
        %p768 = pneg %p109
        %p769 = pneg %p106
        %p770 = pneg %p130
        %p771 = pneg %p127
        %p772 = pneg %p151
        %p773 = pneg %p148
        %p774 = pneg %p172
        %p775 = pneg %p169
        %p776 = pneg %p193
        %p777 = pneg %p190
        %p778 = pneg %p214
        %p779 = pneg %p211
        %p780 = pneg %p235
        %p781 = pneg %p232
        %p782 = pneg %p256
        %p783 = pneg %p253
        %p784 = pneg %p277
        %p785 = pneg %p274
        %p786 = pneg %p298
        %p787 = pneg %p295
        %p788 = pneg %p319
        %p789 = pneg %p316
        %p790 = pneg %p340
        %p791 = pneg %p337
        %p792 = pneg %p361
        %p793 = pneg %p358
        %p794 = pneg %p382
        %p795 = pneg %p379
        %p796 = pneg %p403
        %p797 = pneg %p400
        %p798 = pneg %p429
        %p799 = pneg %p426
        %p800 = scmp.lt.s32.totalorder %s41, 1
        %s801 = scalar_select %p800, %s41, 1
        %s802 = smul.addr %s801, 8
        %s803 = scalar_lea.vmem %s17, %s802
        %p804 = pneg %p455
        %p805 = pneg %p452
        %s806 = sand.u32 %s442, 1
        %s807 = scalar_lea.sflag [#allocation4], %s806
        %s808 = sand.u32 %s442, 1
        %s809 = smul.addr %s808, 16
        %s810 = scalar_lea.vmem [#allocation23], %s809
        %p811 = pneg %p481
        %p812 = pneg %p478
        %p813 = scmp.lt.s32.totalorder %s41, 1
        %s814 = scalar_select %p813, %s41, 1
        %s815 = smul.addr %s814, 8
        %s816 = scalar_lea.vmem %s19, %s815
        %p817 = scmp.lt.s32.totalorder %s41, 1
        %s818 = scalar_select %p817, %s41, 1
        %s819 = smul.addr %s818, 8
        %s820 = scalar_lea.vmem %s0, %s819
        %p821 = scmp.lt.s32.totalorder %s41, 1
        %s822 = scalar_select %p821, %s41, 1
        %s823 = smul.addr %s822, 8
        %s824 = scalar_lea.vmem %s1, %s823
        %p825 = scmp.lt.s32.totalorder %s41, 1
        %s826 = scalar_select %p825, %s41, 1
        %s827 = smul.addr %s826, 8
        %s828 = scalar_lea.vmem %s17, %s827
        %s829 = smul.u32 2, %s41
        %p830 = scmp.lt.s32.totalorder %s41, 1
        %s831 = scalar_select %p830, %s41, 1
        %s832 = smul.addr %s831, 8
        %s833 = scalar_lea.vmem %s19, %s832
        %v834 = vld [vmem:[#allocation2] sm:$0xff]
        %v835 = vld [vmem:[#allocation2 + $0x8] sm:$0xff]
        %v836 = vld [vmem:[%s820] sm:$0xff]
        %v837 = vld [vmem:[%s5] sm:$0xff]
        %v838 = vld [vmem:[%s5 + $0x8] sm:$0xff]
        %v839 = vld [vmem:[%s5 + $0x10] sm:$0xff]
        %v840 = vld [vmem:[%s5 + $0x18] sm:$0xff]
        %v841 = vld [vmem:[#allocation7] sm:$0x1]
        %v843 = vperm.slane %v841, 0
        %vm845 = vcmask 261120
        %v847 = vsel %vm845, %v836, 0
        %849 = vmatpush.msra.mxu0 0.0
        %850 = vmatpush.msra.mxu0 0.0
        %851 = vmatpush.msra.mxu0 0.0
        %852 = vmatpush.msra.mxu0 0.0
        %853 = vmatpush.msra.mxu0 0.0
        %854 = vmatpush.msra.mxu0 0.0
        %855 = vmatpush.msra.mxu0 0.0
        %856 = vmatpush.msra.mxu0 0.0
        %857 = vmatpush.msra.mxu0 0.0
        %858 = vmatpush.msra.mxu0 0.0
        %859 = vmatpush.msra.mxu0 0.0
        %860 = vmatpush.msra.mxu0 0.0
        %861 = vmatpush.msra.mxu0 %v840
        %862 = vmatpush.msra.mxu0 %v839
        %863 = vmatpush.msra.mxu0 %v838
        %864 = vmatpush.msra.mxu0 %v837
        %865 = vmatmul.f32.gmra.mxu0 %v847
        %v866 = vpop.f32.mrf.mxu0
        %v867 = vadd.f32 %v843, %v866
        %868 = vdwg.mxu0
        %v869 = vld [vmem:[%s3] sm:$0xff]
        %v870 = vld [vmem:[%s3 + $0x8] sm:$0xff]
        %v871 = vld [vmem:[%s3 + $0x10] sm:$0xff]
        %v872 = vld [vmem:[%s3 + $0x18] sm:$0xff]
        %v873 = vld [vmem:[#allocation5] sm:$0x1]
        %v875 = vperm.slane %v873, 0
        %v878 = vsel %vm845, %v834, 0
        %v881 = vsel %vm845, %v835, 0
        %883 = vmatpush.msra.mxu0 0.0
        %884 = vmatpush.msra.mxu0 0.0
        %885 = vmatpush.msra.mxu0 0.0
        %886 = vmatpush.msra.mxu0 0.0
        %887 = vmatpush.msra.mxu0 0.0
        %888 = vmatpush.msra.mxu0 0.0
        %889 = vmatpush.msra.mxu0 0.0
        %890 = vmatpush.msra.mxu0 0.0
        %891 = vmatpush.msra.mxu0 0.0
        %892 = vmatpush.msra.mxu0 0.0
        %893 = vmatpush.msra.mxu0 0.0
        %894 = vmatpush.msra.mxu0 0.0
        %895 = vmatpush.msra.mxu0 %v872
        %896 = vmatpush.msra.mxu0 %v871
        %897 = vmatpush.msra.mxu0 %v870
        %898 = vmatpush.msra.mxu0 %v869
        %899 = vmatmul.f32.gmra.mxu0 %v878
        %v900 = vpop.f32.mrf.mxu0
        %v901 = vadd.f32 %v875, %v900
        %902 = vmatmul.f32.gmra.mxu0 %v881
        %v903 = vpop.f32.mrf.mxu0
        %v904 = vadd.f32 %v875, %v903
        %905 = vdwg.mxu0
        %v906 = vmul.f32 %v901, 0.25
        %v907 = vmul.f32 %v904, 0.25
        %vm908 = vcmask 130048
        %v910 = vsel %vm908, %v906, 0
        %v913 = vsel %vm908, %v907, 0
        %v916 = vsel %vm908, %v867, 0
        %918 = vmatpush.xpose.msra.mxu0 0.0
        %919 = vmatpush.xpose.msra.mxu0 0.0
        %920 = vmatpush.xpose.msra.mxu0 0.0
        %921 = vmatpush.xpose.msra.mxu0 0.0
        %922 = vmatpush.xpose.msra.mxu0 0.0
        %923 = vmatpush.xpose.msra.mxu0 0.0
        %924 = vmatpush.xpose.msra.mxu0 0.0
        %925 = vmatpush.xpose.msra.mxu0 0.0
        %926 = vmatpush.xpose.msra.mxu0 0.0
        %927 = vmatpush.xpose.msra.mxu0 0.0
        %928 = vmatpush.xpose.msra.mxu0 0.0
        %929 = vmatpush.xpose.msra.mxu0 0.0
        %930 = vmatpush.xpose.msra.mxu0 0.0
        %931 = vmatpush.xpose.msra.mxu0 0.0
        %932 = vmatpush.xpose.msra.mxu0 0.0
        %933 = vmatpush.xpose.msra.mxu0 %v916
        %934 = vmatmul.f32.gmra.mxu0 %v910
        %v935 = vpop.f32.mrf.mxu0
        %v936 = vadd.f32 0.0, %v935
        %937 = vmatmul.f32.gmra.mxu0 %v913
        %v938 = vpop.f32.mrf.mxu0
        %v939 = vadd.f32 0.0, %v938
        %940 = vdwg.mxu0
        %vm941 = vcmask 64512
        %v942 = vsel %vm941, %v936, -inf
        %943 = vmax.xlane.f32.xlu0 %v942
        %v944 = vpop.xlane.xlu0 %943
        %v945 = vsel %vm941, %v939, -inf
        %946 = vmax.xlane.f32.xlu0 %v945
        %v947 = vpop.xlane.xlu0 %946
        %v948 = vsub.f32 %v936, %v944
        %v949 = vsub.f32 %v939, %v947
        %v950 = vmul.f32 %v948, 1.442695
        %v951 = vpow.pop %v950
        %v952 = vmul.f32 %v949, 1.442695
        %v953 = vpow.pop %v952
        %v954 = vsel %vm941, %v951, 0.0
        %955 = vadd.xlane.f32.xlu0 %v954
        %v956 = vpop.xlane.xlu0 %955
        %v957 = vsel %vm941, %v953, 0.0
        %958 = vadd.xlane.f32.xlu0 %v957
        %v959 = vpop.xlane.xlu0 %958
        %v960 = vrcp.pop %v956
        %v961 = vrcp.pop %v959
        %v962 = vmul.f32 %v951, %v960
        %v963 = vmul.f32 %v953, %v961
        %964 = vrot.lane.b32.xlu0 %v867, 112
        %v965 = vpop.permute.xlu0 %964
        %v968 = vsel %vm941, %v962, 0
        %v971 = vsel %vm941, %v963, 0
        %973 = vmatpush.msra.mxu0 0.0
        %974 = vmatpush.msra.mxu0 0.0
        %975 = vmatpush.msra.mxu0 0.0
        %976 = vmatpush.msra.mxu0 0.0
        %977 = vmatpush.msra.mxu0 0.0
        %978 = vmatpush.msra.mxu0 0.0
        %979 = vmatpush.msra.mxu0 0.0
        %980 = vmatpush.msra.mxu0 0.0
        %981 = vmatpush.msra.mxu0 0.0
        %982 = vmatpush.msra.mxu0 0.0
        %983 = vmatpush.msra.mxu0 0.0
        %984 = vmatpush.msra.mxu0 0.0
        %985 = vmatpush.msra.mxu0 0.0
        %986 = vmatpush.msra.mxu0 0.0
        %987 = vmatpush.msra.mxu0 0.0
        %988 = vmatpush.msra.mxu0 %v965
        %989 = vmatmul.f32.gmra.mxu0 %v968
        %v990 = vpop.f32.mrf.mxu0
        %v991 = vadd.f32 0.0, %v990
        %992 = vmatmul.f32.gmra.mxu0 %v971
        %v993 = vpop.f32.mrf.mxu0
        %v994 = vadd.f32 0.0, %v993
        %995 = vdwg.mxu0
        %v996 = vld [vmem:[#allocation8] sm:$0xff]
        %v997 = vld [vmem:[#allocation8 + $0x8] sm:$0xff]
        %v998 = vld [vmem:[#allocation10] sm:$0x1]
        %v1000 = vperm.slane %v998, 0
        %v1003 = vsel %vm908, %v991, 0
        %v1006 = vsel %vm908, %v994, 0
        %1008 = vmatpush.msra.mxu0 0.0
        %1009 = vmatpush.msra.mxu0 0.0
        %1010 = vmatpush.msra.mxu0 0.0
        %1011 = vmatpush.msra.mxu0 0.0
        %1012 = vmatpush.msra.mxu0 0.0
        %1013 = vmatpush.msra.mxu0 0.0
        %1014 = vmatpush.msra.mxu0 0.0
        %1015 = vmatpush.msra.mxu0 0.0
        %1016 = vmatpush.msra.mxu0 0.0
        %1017 = vmatpush.msra.mxu0 0.0
        %1018 = vmatpush.msra.mxu0 0.0
        %1019 = vmatpush.msra.mxu0 0.0
        %1020 = vmatpush.msra.mxu0 0.0
        %1021 = vmatpush.msra.mxu0 0.0
        %1022 = vmatpush.msra.mxu0 %v997
        %1023 = vmatpush.msra.mxu0 %v996
        %1024 = vmatmul.f32.gmra.mxu0 %v1003
        %v1025 = vpop.f32.mrf.mxu0
        %v1026 = vadd.f32 %v1000, %v1025
        %1027 = vmatmul.f32.gmra.mxu0 %v1006
        %v1028 = vpop.f32.mrf.mxu0
        %v1029 = vadd.f32 %v1000, %v1028
        %1030 = vdwg.mxu0
        %v1031 = vadd.f32 %v834, %v1026
        %v1032 = vadd.f32 %v835, %v1029
        %v1033 = vld [vmem:[#allocation11] sm:$0x1]
        %v1034 = vld [vmem:[#allocation13] sm:$0x1]
        %v1035 = vsel %vm845, %v1031, 0.0
        %1036 = vadd.xlane.f32.xlu0 %v1035
        %v1037 = vpop.xlane.xlu0 %1036
        %v1038 = vsel %vm845, %v1032, 0.0
        %1039 = vadd.xlane.f32.xlu0 %v1038
        %v1040 = vpop.xlane.xlu0 %1039
        %v1041 = vrcp.pop 32.0
        %v1042 = vmul.f32 32.0, %v1041
        %v1043 = vsub.f32 1.0, %v1042
        %v1044 = vmul.f32 %v1041, %v1043
        %v1045 = vadd.f32 %v1041, %v1044
        %vm1046 = vweird.f32 %v1041
        %v1047 = vsel %vm1046, %v1041, %v1045
        %v1048 = vmul.f32 %v1037, %v1047
        %v1049 = vmul.f32 %v1040, %v1047
        %v1050 = vsub.f32 %v1031, %v1048
        %v1051 = vsub.f32 %v1032, %v1049
        %v1052 = vmul.f32 %v1050, %v1050
        %v1053 = vmul.f32 %v1051, %v1051
        %v1054 = vsel %vm845, %v1052, 0.0
        %1055 = vadd.xlane.f32.xlu0 %v1054
        %v1056 = vpop.xlane.xlu0 %1055
        %v1057 = vsel %vm845, %v1053, 0.0
        %1058 = vadd.xlane.f32.xlu0 %v1057
        %v1059 = vpop.xlane.xlu0 %1058
        %v1060 = vmul.f32 %v1056, %v1047
        %v1061 = vmul.f32 %v1059, %v1047
        %v1062 = vadd.f32 %v1060, 1e-05
        %v1063 = vadd.f32 %v1061, 1e-05
        %v1064 = vrsqrt.pop %v1062
        %v1065 = vmul.f32 %v1064, %v1062
        %v1066 = vmul.f32 %v1065, %v1064
        %v1067 = vmul.f32 0.5, %v1066
        %v1068 = vsub.f32 1.5, %v1067
        %v1069 = vmul.f32 %v1064, %v1068
        %vm1070 = vweird.f32 %v1062
        %vm1071 = vweird.f32 %v1064
        %vm1072 = vmor %vm1070, %vm1071
        %v1073 = vsel %vm1072, %v1064, %v1069
        %v1074 = vrsqrt.pop %v1063
        %v1075 = vmul.f32 %v1074, %v1063
        %v1076 = vmul.f32 %v1075, %v1074
        %v1077 = vmul.f32 0.5, %v1076
        %v1078 = vsub.f32 1.5, %v1077
        %v1079 = vmul.f32 %v1074, %v1078
        %vm1080 = vweird.f32 %v1063
        %vm1081 = vweird.f32 %v1074
        %vm1082 = vmor %vm1080, %vm1081
        %v1083 = vsel %vm1082, %v1074, %v1079
        %v1084 = vmul.f32 %v1050, %v1073
        %v1085 = vmul.f32 %v1051, %v1083
        %v1087 = vperm.slane %v1033, 0
        %v1089 = vmul.f32 %v1084, %v1087
        %v1090 = vmul.f32 %v1085, %v1087
        %v1092 = vperm.slane %v1034, 0
        %v1094 = vadd.f32 %v1089, %v1092
        %v1095 = vadd.f32 %v1090, %v1092
        %v1096 = vld [vmem:[#allocation14] sm:$0xff]
        %v1097 = vld [vmem:[#allocation14 + $0x8] sm:$0xff]
        %v1098 = vld [vmem:[#allocation14 + $0x10] sm:$0xff]
        %v1099 = vld [vmem:[#allocation14 + $0x18] sm:$0xff]
        %v1100 = vld [vmem:[#allocation16] sm:$0x1]
        %v1102 = vperm.slane %v1100, 0
        %v1105 = vsel %vm845, %v1094, 0
        %v1108 = vsel %vm845, %v1095, 0
        %1110 = vmatpush.msra.mxu0 0.0
        %1111 = vmatpush.msra.mxu0 0.0
        %1112 = vmatpush.msra.mxu0 0.0
        %1113 = vmatpush.msra.mxu0 0.0
        %1114 = vmatpush.msra.mxu0 0.0
        %1115 = vmatpush.msra.mxu0 0.0
        %1116 = vmatpush.msra.mxu0 0.0
        %1117 = vmatpush.msra.mxu0 0.0
        %1118 = vmatpush.msra.mxu0 0.0
        %1119 = vmatpush.msra.mxu0 0.0
        %1120 = vmatpush.msra.mxu0 0.0
        %1121 = vmatpush.msra.mxu0 0.0
        %1122 = vmatpush.msra.mxu0 %v1099
        %1123 = vmatpush.msra.mxu0 %v1098
        %1124 = vmatpush.msra.mxu0 %v1097
        %1125 = vmatpush.msra.mxu0 %v1096
        %1126 = vmatmul.f32.gmra.mxu0 %v1105
        %v1127 = vpop.f32.mrf.mxu0
        %v1128 = vadd.f32 %v1102, %v1127
        %1129 = vmatmul.f32.gmra.mxu0 %v1108
        %v1130 = vpop.f32.mrf.mxu0
        %v1131 = vadd.f32 %v1102, %v1130
        %1132 = vdwg.mxu0
        %v1133 = vmul.f32 %v1128, 0.25
        %v1134 = vmul.f32 %v1131, 0.25
        %1137 = vrot.lane.b32.xlu0 %v1128, 112
        %v1138 = vpop.permute.xlu0 %1137
        %1139 = vrot.lane.b32.xlu0 %v1131, 112
        %v1140 = vpop.permute.xlu0 %1139
        %v1142 = vsel %vm908, %v1133, 0
        %v1145 = vsel %vm908, %v1134, 0
        %v1147 = vsel %vm908, %v1138, 0
        %v1149 = vsel %vm908, %v1140, 0
        %1151 = vmatpush.xpose.msra.mxu0 0.0
        %1152 = vmatpush.xpose.msra.mxu0 0.0
        %1153 = vmatpush.xpose.msra.mxu0 0.0
        %1154 = vmatpush.xpose.msra.mxu0 0.0
        %1155 = vmatpush.xpose.msra.mxu0 0.0
        %1156 = vmatpush.xpose.msra.mxu0 0.0
        %1157 = vmatpush.xpose.msra.mxu0 0.0
        %1158 = vmatpush.xpose.msra.mxu0 0.0
        %1159 = vmatpush.xpose.msra.mxu0 0.0
        %1160 = vmatpush.xpose.msra.mxu0 0.0
        %1161 = vmatpush.xpose.msra.mxu0 0.0
        %1162 = vmatpush.xpose.msra.mxu0 0.0
        %1163 = vmatpush.xpose.msra.mxu0 0.0
        %1164 = vmatpush.xpose.msra.mxu0 0.0
        %1165 = vmatpush.xpose.msra.mxu0 %v1149
        %1166 = vmatpush.xpose.msra.mxu0 %v1147
        %1167 = vmatmul.f32.gmra.mxu0 %v1142
        %v1168 = vpop.f32.mrf.mxu0
        %v1169 = vadd.f32 0.0, %v1168
        %1170 = vmatmul.f32.gmra.mxu0 %v1145
        %v1171 = vpop.f32.mrf.mxu0
        %v1172 = vadd.f32 0.0, %v1171
        %1173 = vdwg.mxu0
        %v1174 = vsel %vm908, %v1169, -inf
        %1175 = vmax.xlane.f32.xlu0 %v1174
        %v1176 = vpop.xlane.xlu0 %1175
        %v1177 = vsel %vm908, %v1172, -inf
        %1178 = vmax.xlane.f32.xlu0 %v1177
        %v1179 = vpop.xlane.xlu0 %1178
        %v1180 = vsub.f32 %v1169, %v1176
        %v1181 = vsub.f32 %v1172, %v1179
        %v1182 = vmul.f32 %v1180, 1.442695
        %v1183 = vpow.pop %v1182
        %v1184 = vmul.f32 %v1181, 1.442695
        %v1185 = vpow.pop %v1184
        %v1186 = vsel %vm908, %v1183, 0.0
        %1187 = vadd.xlane.f32.xlu0 %v1186
        %v1188 = vpop.xlane.xlu0 %1187
        %v1189 = vsel %vm908, %v1185, 0.0
        %1190 = vadd.xlane.f32.xlu0 %v1189
        %v1191 = vpop.xlane.xlu0 %1190
        %v1192 = vrcp.pop %v1188
        %v1193 = vrcp.pop %v1191
        %v1194 = vmul.f32 %v1183, %v1192
        %v1195 = vmul.f32 %v1185, %v1193
        %1196 = vrot.lane.b32.xlu0 %v1128, 96
        %v1197 = vpop.permute.xlu0 %1196
        %1198 = vrot.lane.b32.xlu0 %v1131, 96
        %v1199 = vpop.permute.xlu0 %1198
        %v1203 = vsel %vm908, %v1194, 0
        %v1206 = vsel %vm908, %v1195, 0
        %1208 = vmatpush.msra.mxu0 0.0
        %1209 = vmatpush.msra.mxu0 0.0
        %1210 = vmatpush.msra.mxu0 0.0
        %1211 = vmatpush.msra.mxu0 0.0
        %1212 = vmatpush.msra.mxu0 0.0
        %1213 = vmatpush.msra.mxu0 0.0
        %1214 = vmatpush.msra.mxu0 0.0
        %1215 = vmatpush.msra.mxu0 0.0
        %1216 = vmatpush.msra.mxu0 0.0
        %1217 = vmatpush.msra.mxu0 0.0
        %1218 = vmatpush.msra.mxu0 0.0
        %1219 = vmatpush.msra.mxu0 0.0
        %1220 = vmatpush.msra.mxu0 0.0
        %1221 = vmatpush.msra.mxu0 0.0
        %1222 = vmatpush.msra.mxu0 %v1199
        %1223 = vmatpush.msra.mxu0 %v1197
        %1224 = vmatmul.f32.gmra.mxu0 %v1203
        %v1225 = vpop.f32.mrf.mxu0
        %v1226 = vadd.f32 0.0, %v1225
        %1227 = vmatmul.f32.gmra.mxu0 %v1206
        %v1228 = vpop.f32.mrf.mxu0
        %v1229 = vadd.f32 0.0, %v1228
        %1230 = vdwg.mxu0
        %v1231 = vld [vmem:[#allocation17] sm:$0xff]
        %v1232 = vld [vmem:[#allocation17 + $0x8] sm:$0xff]
        %v1233 = vld [vmem:[#allocation19] sm:$0x1]
        %v1235 = vperm.slane %v1233, 0
        %v1238 = vsel %vm908, %v1226, 0
        %v1241 = vsel %vm908, %v1229, 0
        %1243 = vmatpush.msra.mxu0 0.0
        %1244 = vmatpush.msra.mxu0 0.0
        %1245 = vmatpush.msra.mxu0 0.0
        %1246 = vmatpush.msra.mxu0 0.0
        %1247 = vmatpush.msra.mxu0 0.0
        %1248 = vmatpush.msra.mxu0 0.0
        %1249 = vmatpush.msra.mxu0 0.0
        %1250 = vmatpush.msra.mxu0 0.0
        %1251 = vmatpush.msra.mxu0 0.0
        %1252 = vmatpush.msra.mxu0 0.0
        %1253 = vmatpush.msra.mxu0 0.0
        %1254 = vmatpush.msra.mxu0 0.0
        %1255 = vmatpush.msra.mxu0 0.0
        %1256 = vmatpush.msra.mxu0 0.0
        %1257 = vmatpush.msra.mxu0 %v1232
        %1258 = vmatpush.msra.mxu0 %v1231
        %1259 = vmatmul.f32.gmra.mxu0 %v1238
        %v1260 = vpop.f32.mrf.mxu0
        %v1261 = vadd.f32 %v1235, %v1260
        %1262 = vmatmul.f32.gmra.mxu0 %v1241
        %v1263 = vpop.f32.mrf.mxu0
        %v1264 = vadd.f32 %v1235, %v1263
        %1265 = vdwg.mxu0
        %v1266 = vadd.f32 %v1094, %v1261
        %v1267 = vadd.f32 %v1095, %v1264
        %v1268 = vld [vmem:[#allocation20] sm:$0x1]
        %v1269 = vld [vmem:[#allocation22] sm:$0x1]
        %v1270 = vsel %vm845, %v1266, 0.0
        %1271 = vadd.xlane.f32.xlu0 %v1270
        %v1272 = vpop.xlane.xlu0 %1271
        %v1273 = vsel %vm845, %v1267, 0.0
        %1274 = vadd.xlane.f32.xlu0 %v1273
        %v1275 = vpop.xlane.xlu0 %1274
        %v1276 = vmul.f32 %v1272, %v1047
        %v1277 = vmul.f32 %v1275, %v1047
        %v1278 = vsub.f32 %v1266, %v1276
        %v1279 = vsub.f32 %v1267, %v1277
        %v1280 = vmul.f32 %v1278, %v1278
        %v1281 = vmul.f32 %v1279, %v1279
        %v1282 = vsel %vm845, %v1280, 0.0
        %1283 = vadd.xlane.f32.xlu0 %v1282
        %v1284 = vpop.xlane.xlu0 %1283
        %v1285 = vsel %vm845, %v1281, 0.0
        %1286 = vadd.xlane.f32.xlu0 %v1285
        %v1287 = vpop.xlane.xlu0 %1286
        %v1288 = vmul.f32 %v1284, %v1047
        %v1289 = vmul.f32 %v1287, %v1047
        %v1290 = vadd.f32 %v1288, 1e-05
        %v1291 = vadd.f32 %v1289, 1e-05
        %v1292 = vrsqrt.pop %v1290
        %v1293 = vmul.f32 %v1292, %v1290
        %v1294 = vmul.f32 %v1293, %v1292
        %v1295 = vmul.f32 0.5, %v1294
        %v1296 = vsub.f32 1.5, %v1295
        %v1297 = vmul.f32 %v1292, %v1296
        %vm1298 = vweird.f32 %v1290
        %vm1299 = vweird.f32 %v1292
        %vm1300 = vmor %vm1298, %vm1299
        %v1301 = vsel %vm1300, %v1292, %v1297
        %v1302 = vrsqrt.pop %v1291
        %v1303 = vmul.f32 %v1302, %v1291
        %v1304 = vmul.f32 %v1303, %v1302
        %v1305 = vmul.f32 0.5, %v1304
        %v1306 = vsub.f32 1.5, %v1305
        %v1307 = vmul.f32 %v1302, %v1306
        %vm1308 = vweird.f32 %v1291
        %vm1309 = vweird.f32 %v1302
        %vm1310 = vmor %vm1308, %vm1309
        %v1311 = vsel %vm1310, %v1302, %v1307
        %v1312 = vmul.f32 %v1278, %v1301
        %v1313 = vmul.f32 %v1279, %v1311
        %v1315 = vperm.slane %v1268, 0
        %v1317 = vmul.f32 %v1312, %v1315
        %v1318 = vmul.f32 %v1313, %v1315
        %v1320 = vperm.slane %v1269, 0
        %v1322 = vadd.f32 %v1317, %v1320
        %v1323 = vadd.f32 %v1318, %v1320
        %v1324 = vld [vmem:[%s824] sm:$0xff]
        %v1325 = vmul.f32 %v1324, %v1324
        %v1326 = vsel %vm845, %v1325, 0.0
        %1327 = vadd.xlane.f32.xlu0 %v1326
        %v1328 = vpop.xlane.xlu0 %1327
        %v1329 = vmul.f32 %v1322, %v1322
        %v1330 = vmul.f32 %v1323, %v1323
        %v1331 = vsel %vm845, %v1329, 0.0
        %1332 = vadd.xlane.f32.xlu0 %v1331
        %v1333 = vpop.xlane.xlu0 %1332
        %v1334 = vsel %vm845, %v1330, 0.0
        %1335 = vadd.xlane.f32.xlu0 %v1334
        %v1336 = vpop.xlane.xlu0 %1335
        %v1338 = vsel %vm845, %v1324, 0
        %v1341 = vsel %vm845, %v1322, 0
        %v1344 = vsel %vm845, %v1323, 0
        %1346 = vmatpush.xpose.msra.mxu0 0.0
        %1347 = vmatpush.xpose.msra.mxu0 0.0
        %1348 = vmatpush.xpose.msra.mxu0 0.0
        %1349 = vmatpush.xpose.msra.mxu0 0.0
        %1350 = vmatpush.xpose.msra.mxu0 0.0
        %1351 = vmatpush.xpose.msra.mxu0 0.0
        %1352 = vmatpush.xpose.msra.mxu0 0.0
        %1353 = vmatpush.xpose.msra.mxu0 0.0
        %1354 = vmatpush.xpose.msra.mxu0 0.0
        %1355 = vmatpush.xpose.msra.mxu0 0.0
        %1356 = vmatpush.xpose.msra.mxu0 0.0
        %1357 = vmatpush.xpose.msra.mxu0 0.0
        %1358 = vmatpush.xpose.msra.mxu0 0.0
        %1359 = vmatpush.xpose.msra.mxu0 0.0
        %1360 = vmatpush.xpose.msra.mxu0 %v1344
        %1361 = vmatpush.xpose.msra.mxu0 %v1341
        %1362 = vmatmul.f32.gmra.mxu0 %v1338
        %v1363 = vpop.f32.mrf.mxu0
        %v1364 = vadd.f32 0.0, %v1363
        %1365 = vdwg.mxu0
        %v1366 = vmul.f32 %v1364, 2.0
        %v1367 = vsub.f32 %v1328, %v1366
        %v1370 = vlaneseq
        %v1371 = vand.u32 %v1370, 127
        %v1372 = vperm.slane %v1333, %v1371
        %v1373 = vadd.s32 %v1371, 4294967288
        %v1374 = vperm.slane %v1336, %v1373
        %vm1375 = vcmask 130112
        %v1376 = vsel %vm1375, %v1374, %v1372
        %vm1377 = vcmask 1042434
        %v1378 = vsel %vm1377, %v1376, %v1376
        %vm1379 = vcmask 1043459
        %v1380 = vsel %vm1379, %v1376, %v1378
        %vm1381 = vcmask 1044484
        %v1382 = vsel %vm1381, %v1376, %v1380
        %vm1383 = vcmask 1045509
        %v1384 = vsel %vm1383, %v1376, %v1382
        %vm1385 = vcmask 1046534
        %v1386 = vsel %vm1385, %v1376, %v1384
        %vm1387 = vcmask 1047559
        %v1388 = vsel %vm1387, %v1376, %v1386
        %v1390 = vadd.f32 %v1367, %v1388
        %v1391 = vsel %vm908, %v1390, inf
        %1392 = vmin.xlane.f32.xlu0 %v1391
        %v1393 = vpop.xlane.xlu0 %1392
        %vm1394 = vcmp.le.f32.partialorder %v1390, %v1393
        %v1395 = vsel %vm1394, %v1371, 16
        %v1396 = vsel %vm908, %v1395, 2147483647
        %v1397 = vand.u32 %v1396, 65535
        %v1398 = vshra.s32 %v1396, 16
        %v1399 = vcvt.s32.f32 %v1397
        %v1400 = vcvt.s32.f32 %v1398
        %1401 = vmin.xlane.f32.xlu0 %v1400
        %v1402 = vpop.xlane.xlu0 %1401
        %vm1403 = vcmp.eq.f32.partialorder %v1400, %v1402
        %v1404 = vsel %vm1403, %v1399, inf
        %1405 = vmin.xlane.f32.xlu0 %v1404
        %v1406 = vpop.xlane.xlu0 %1405
        %v1407 = vcvt.f32.s32 %v1406
        %v1408 = vcvt.f32.s32 %v1402
        %v1409 = vshll.u32 %v1408, 16
        %v1410 = vadd.s32 %v1409, %v1407
        %vm1411 = vcmp.eq.s32.totalorder %v1371, %v1410
        %v1412 = vsel %vm1411, 1, 0
        %v1413 = vcvt.s32.f32 %v1412
        %v1415 = vsel %vm908, %v1413, 0
        %1417 = vmatpush.msra.mxu0 0.0
        %1418 = vmatpush.msra.mxu0 0.0
        %1419 = vmatpush.msra.mxu0 0.0
        %1420 = vmatpush.msra.mxu0 0.0
        %1421 = vmatpush.msra.mxu0 0.0
        %1422 = vmatpush.msra.mxu0 0.0
        %1423 = vmatpush.msra.mxu0 0.0
        %1424 = vmatpush.msra.mxu0 0.0
        %1425 = vmatpush.msra.mxu0 0.0
        %1426 = vmatpush.msra.mxu0 0.0
        %1427 = vmatpush.msra.mxu0 0.0
        %1428 = vmatpush.msra.mxu0 0.0
        %1429 = vmatpush.msra.mxu0 0.0
        %1430 = vmatpush.msra.mxu0 0.0
        %1431 = vmatpush.msra.mxu0 %v1323
        %1432 = vmatpush.msra.mxu0 %v1322
        %1433 = vmatmul.f32.gmra.mxu0 %v1415
        %v1434 = vpop.f32.mrf.mxu0
        %v1435 = vadd.f32 0.0, %v1434
        %1436 = vdwg.mxu0
        %1437 = vst.msk [vmem:[%s828] sm:$0xff] %vm845, %v1435
        %1438 = vst.msk [vmem:[%s810] sm:$0xff] %vm845, %v1322
        %1439 = vst.msk [vmem:[%s810 + $0x8] sm:$0xff] %vm845, %v1323
        %1440 = vst.msk [vmem:[%s833] sm:$0xff] %vm908, %v1413
        %p1441 = scmp.lt.s32.totalorder %s41, 1
        %s1442 = scalar_select %p1441, %s41, 1
        %s1443 = smul.addr %s1442, 8
        %s1444 = scalar_lea.vmem %s17, %s1443
        %s1445 = sand.u32 %s442, 1
        %s1446 = scalar_lea.sflag [#allocation4], %s1445
        %s1447 = sand.u32 %s442, 1
        %s1448 = smul.addr %s1447, 16
        %s1449 = scalar_lea.vmem [#allocation23], %s1448
        %p1450 = scmp.lt.s32.totalorder %s41, 1
        %s1451 = scalar_select %p1450, %s41, 1
        %s1452 = smul.addr %s1451, 8
        %s1453 = scalar_lea.vmem %s19, %s1452
        // Predicated region
        $region141: #{variational_quantization_forward.1} parent=87 // pred_check
          %p1454 = pneg %p426
        $region142: #{variational_quantization_forward.1} parent=87 // pred_check_branch
          %1456 = sbr.rel (%p1454) target = $region144
        $region143: #{variational_quantization_forward.1} parent=87 // pred_region
          _
        $region144: #{variational_quantization_forward.1} parent=87 // pred_fallthru
          _
        // Predicated region
        $region145: #{variational_quantization_forward.1} parent=87 // pred_check
          %p1457 = pneg %p452
        $region146: #{variational_quantization_forward.1} parent=87 // pred_check_branch
          %1459 = sbr.rel (%p1457) target = $region148
        $region147: #{variational_quantization_forward.1} parent=87 // pred_region
          %s1460 = smul.u32 2, %s41
          %1462 = vsyncadd %s1446, 0
          %s1463 = smul.addr %s1460, 8
          %s1464 = scalar_lea.hbm %s18, %s1463
          %s1465 = sshll.u32 %s1449, 4
          %s1466 = int_to_ptr.vmem [resolvable:$true] %s1465
          %s1467 = sshll.u32 %s1464, 4
          %s1468 = int_to_ptr.hbm [resolvable:$true] %s1467
          %1473 = dma.vmem_to_hbm [thread:$0]  %s1466, 256, %s1468, %s1446, 128, 128, 8
        $region148: #{variational_quantization_forward.1} parent=87 // pred_fallthru
          _
        // Predicated region
        $region149: #{variational_quantization_forward.1} parent=87 // pred_check
          %p1474 = pneg %p478
        $region150: #{variational_quantization_forward.1} parent=87 // pred_check_branch
          %1476 = sbr.rel (%p1474) target = $region152
        $region151: #{variational_quantization_forward.1} parent=87 // pred_region
          _
        $region152: #{variational_quantization_forward.1} parent=87 // pred_fallthru
          _
      $region88: #{variational_quantization_forward.1} parent=5 // pred_fallthru
        _
      %p1477 = scmp.le.s32.totalorder 2, %s36
      // Predicated region
      $region153: #{variational_quantization_forward.1} parent=5 // pred_check
        %p1478 = pneg %p1477
      $region154: #{variational_quantization_forward.1} parent=5 // pred_check_branch
        %1480 = sbr.rel (%p1478) target = $region156
      $region155: #{variational_quantization_forward.1} parent=5 // pred_region
        %s1481 = ssub.s32 %s36, 2
        // Predicated region
        $region157: #{variational_quantization_forward.1} parent=155 // pred_check
          %p1482 = pneg %p432
        $region158: #{variational_quantization_forward.1} parent=155 // pred_check_branch
          %1484 = sbr.rel (%p1482) target = $region160
        $region159: #{variational_quantization_forward.1} parent=155 // pred_region
          %p1485 = scmp.lt.s32.totalorder %s42, 1
          %s1486 = scalar_select %p1485, %s42, 1
          %s1487 = smul.addr %s1486, 8
          %s1488 = scalar_lea.vmem %s17, %s1487
        $region160: #{variational_quantization_forward.1} parent=155 // pred_fallthru
          _
        // Predicated region
        $region161: #{variational_quantization_forward.1} parent=155 // pred_check
          %p1489 = pneg %p458
        $region162: #{variational_quantization_forward.1} parent=155 // pred_check_branch
          %1491 = sbr.rel (%p1489) target = $region164
        $region163: #{variational_quantization_forward.1} parent=155 // pred_region
          %s1492 = sand.u32 %s443, 1
          %s1493 = scalar_lea.sflag [#allocation4], %s1492
          %s1494 = sand.u32 %s443, 1
          %s1495 = smul.addr %s1494, 16
          %s1496 = scalar_lea.vmem [#allocation23], %s1495
          %1498 = dma.done %s1493, 256
        $region164: #{variational_quantization_forward.1} parent=155 // pred_fallthru
          _
        // Predicated region
        $region165: #{variational_quantization_forward.1} parent=155 // pred_check
          %p1499 = pneg %p484
        $region166: #{variational_quantization_forward.1} parent=155 // pred_check_branch
          %1501 = sbr.rel (%p1499) target = $region168
        $region167: #{variational_quantization_forward.1} parent=155 // pred_region
          %p1502 = scmp.lt.s32.totalorder %s42, 1
          %s1503 = scalar_select %p1502, %s42, 1
          %s1504 = smul.addr %s1503, 8
          %s1505 = scalar_lea.vmem %s19, %s1504
        $region168: #{variational_quantization_forward.1} parent=155 // pred_fallthru
          _
      $region156: #{variational_quantization_forward.1} parent=5 // pred_fallthru
        _
    $region6: #{variational_quantization_forward.1} parent=1 // loop_footer
      %s40 = sadd.s32 1, %s36
    $region7: #{variational_quantization_forward.1} parent=1 // loop_footer_branch
      %35 = sbr.rel target = $region3
    $region8: #{variational_quantization_forward.1} parent=1 // loop_exit
      _
    %1506 = vsyncpa [#allocation3], 1
    %s1507 = scalar_lea.sflag [#allocation3], 1
    %1508 = vsyncpa %s1507, 1
    %1509 = vsyncpa [#allocation6], 1
    %1510 = vsyncpa [#allocation9], 1
    %1511 = vsyncpa [#allocation12], 1
    %1512 = vsyncpa [#allocation15], 1
    %1513 = vsyncpa [#allocation18], 1
    %1514 = vsyncpa [#allocation21], 1
    %1515 = vsyncpa [#allocation4], 1
    %s1516 = scalar_lea.sflag [#allocation4], 1
    %1517 = vsyncpa %s1516, 1

</llo_original>
